<compile_context>
chip_gen: v6e
topology: v6e:2x2x1
jax: 0.10.0
libtpu: 0.0.40
codegen_flags: <defaults>
</compile_context>

<pallas_src>
import functools

import jax
import jax.numpy as jnp
from jax.experimental import pallas as pl
from jax.experimental.pallas import tpu as pltpu

_LANE = 128
_N_ALIGN = 256     # node-count padding multiple (= reduction tile)
_TK = 256          # reduction (column) tile for A / node tile for pooling


def _round_up(n, m):
    return ((n + m - 1) // m) * m


def _pad2d(x, rows, cols):
    r, c = x.shape
    return jnp.pad(x, ((0, rows - r), (0, cols - c)))


def _vmem_limit_bytes():
    """~70% of this chip's physical VMEM, capped at 100 MiB.

    ~89 MiB on v5e/v6e (128 MiB physical), ~44 MiB on v7x (64 MiB physical).
    """
    try:
        cap = int(pltpu.get_tpu_info().vmem_capacity_bytes)
    except Exception:
        cap = 64 * 1024 * 1024
    return min(100 * 1024 * 1024, int(cap * 0.7))


# ------------------------ fused small-graph kernel ---------------------------
# Whole problem resident in VMEM: 3 GCN layers + mean-pool + classifier in a
# single grid=() kernel.  A_hat is read from HBM exactly once.

def _fused_gcn_kernel(a_ref, h0_ref, w1_ref, b1_ref, w2_ref, b2_ref,
                      w3_ref, b3_ref, p_ref, wc1_ref, bc1_ref,
                      wc2_ref, bc2_ref, out_ref):
    a = a_ref[...]

    def layer(h, w_ref_, b_ref_, relu):
        t = jnp.dot(a, h, preferred_element_type=jnp.float32)        # A @ H
        # Keep the f32 partial sums in f32 through the dense transform.
        t = jnp.dot(t, w_ref_[...].astype(jnp.float32),
                    preferred_element_type=jnp.float32) + b_ref_[...]
        if relu:
            t = jnp.maximum(t, 0.0)
        return t

    h1 = layer(h0_ref[...], w1_ref, b1_ref, True).astype(a.dtype)
    h2 = layer(h1, w2_ref, b2_ref, True).astype(a.dtype)
    h3 = layer(h2, w3_ref, b3_ref, False)                            # stays f32

    g = jnp.dot(p_ref[...], h3, preferred_element_type=jnp.float32)  # mean pool
    g = jnp.maximum(jnp.dot(g, wc1_ref[...], preferred_element_type=jnp.float32)
                    + bc1_ref[...], 0.0)
    out_ref[...] = (jnp.dot(g, wc2_ref[...], preferred_element_type=jnp.float32)
                    + bc2_ref[...])


# --------------------------- per-layer GCN kernel ----------------------------
# out = maybe_relu( (A @ H) @ W + b ).  A tiled (tm, tk) over a (rows, cols)
# grid; the col axis is the reduction and runs last.  acc_ref is a persistent
# f32 VMEM accumulator holding the current row-tile of A @ H.  H is either
# fully VMEM-resident (sliced in-kernel) or streamed per column tile.

def _gcn_layer_kernel(a_ref, h_ref, w_ref, b_ref, out_ref, acc_ref, *,
                      apply_relu, h_resident, tk):
    k = pl.program_id(1)

    @pl.when(k == 0)
    def _():
        acc_ref[...] = jnp.zeros_like(acc_ref)

    if h_resident:
        start = pl.multiple_of(k * tk, tk)
        h_blk = h_ref[pl.ds(start, tk), :]
    else:
        h_blk = h_ref[...]

    # bf16 x bf16 -> f32 accumulation on the MXU (f32 x f32 in strict mode).
    acc_ref[...] += jnp.dot(a_ref[...], h_blk,
                            preferred_element_type=jnp.float32)

    @pl.when(k == pl.num_programs(1) - 1)
    def _():
        # f32 accumulator stays f32 through the @W finalize (accuracy knob).
        y = jnp.dot(acc_ref[...], w_ref[...].astype(jnp.float32),
                    preferred_element_type=jnp.float32) + b_ref[...]
        if apply_relu:
            y = jnp.maximum(y, 0.0)
        out_ref[...] = y.astype(out_ref.dtype)


def _gcn_layer(a_p, h_in, w, b, *, apply_relu, out_dtype, tm, tk, vmem_limit):
    n_pad = a_p.shape[0]
    f_in = h_in.shape[1]
    f_out = w.shape[1]
    n_row = n_pad // tm
    n_col = n_pad // tk

    h_bytes = h_in.size * jnp.dtype(h_in.dtype).itemsize
    # Keep H fully VMEM-resident (no per-row-tile re-streaming) when it fits
    # comfortably alongside the A tiles / accumulator / output buffers.
    h_resident = 2 * h_bytes <= vmem_limit // 3

    if h_resident:
        h_spec = pl.BlockSpec((n_pad, f_in), lambda i, k: (0, 0))
        h_stream_bytes = h_bytes
    else:
        h_spec = pl.BlockSpec((tk, f_in), lambda i, k: (k, 0))
        h_stream_bytes = n_row * h_bytes

    flops = 2 * n_pad * n_pad * f_in + 2 * n_pad * f_in * f_out
    bytes_accessed = (
        a_p.size * jnp.dtype(a_p.dtype).itemsize
        + h_stream_bytes
        + w.size * jnp.dtype(w.dtype).itemsize
        + b.size * jnp.dtype(b.dtype).itemsize
        + n_pad * f_out * jnp.dtype(out_dtype).itemsize
    )

    kernel = functools.partial(_gcn_layer_kernel, apply_relu=apply_relu,
                               h_resident=h_resident, tk=tk)
    return pl.pallas_call(
        kernel,
        out_shape=jax.ShapeDtypeStruct((n_pad, f_out), out_dtype),
        grid_spec=pltpu.PrefetchScalarGridSpec(
            num_scalar_prefetch=0,
            grid=(n_row, n_col),
            in_specs=[
                pl.BlockSpec((tm, tk), lambda i, k: (i, k)),       # A row/col tile
                h_spec,                                            # H (resident or streamed)
                pl.BlockSpec((f_in, f_out), lambda i, k: (0, 0)),  # W (resident)
                pl.BlockSpec((1, f_out), lambda i, k: (0, 0)),     # bias (resident)
            ],
            out_specs=pl.BlockSpec((tm, f_out), lambda i, k: (i, 0)),
            scratch_shapes=[pltpu.VMEM((tm, f_in), jnp.float32)],
        ),
        compiler_params=pltpu.CompilerParams(
            dimension_semantics=("parallel", "arbitrary"),
            vmem_limit_bytes=vmem_limit,
        ),
        cost_estimate=pl.CostEstimate(flops=int(flops), transcendentals=0,
                                      bytes_accessed=int(bytes_accessed)),
    )(a_p, h_in, w, b)


# -------------------- global-mean-pool + classifier kernel -------------------
# Tiled over the node (reduction) axis so P and h3 never have to be whole-array
# resident in VMEM.  Accumulator (G_pad, hid) in f32; classifier in finalize.

def _pool_classifier_kernel(p_ref, h_ref, wc1_ref, bc1_ref, wc2_ref, bc2_ref,
                            out_ref, acc_ref):
    r = pl.program_id(0)

    @pl.when(r == 0)
    def _():
        acc_ref[...] = jnp.zeros_like(acc_ref)

    acc_ref[...] += jnp.dot(p_ref[...], h_ref[...].astype(jnp.float32),
                            preferred_element_type=jnp.float32)

    @pl.when(r == pl.num_programs(0) - 1)
    def _():
        g = jnp.dot(acc_ref[...], wc1_ref[...],
                    preferred_element_type=jnp.float32) + bc1_ref[...]
        g = jnp.maximum(g, 0.0)
        out_ref[...] = (jnp.dot(g, wc2_ref[...],
                                preferred_element_type=jnp.float32) + bc2_ref[...])


def _pool_classifier(p_p, h3, wc1, bc1, wc2, bc2, *, tk, vmem_limit):
    g_pad, n_pad = p_p.shape
    hid_pad = h3.shape[1]
    half_pad = wc1.shape[1]
    out_pad = wc2.shape[1]
    return pl.pallas_call(
        _pool_classifier_kernel,
        out_shape=jax.ShapeDtypeStruct((g_pad, out_pad), jnp.float32),
        grid_spec=pltpu.PrefetchScalarGridSpec(
            num_scalar_prefetch=0,
            grid=(n_pad // tk,),
            in_specs=[
                pl.BlockSpec((g_pad, tk), lambda r: (0, r)),        # P node chunk
                pl.BlockSpec((tk, hid_pad), lambda r: (r, 0)),      # h3 node chunk
                pl.BlockSpec((hid_pad, half_pad), lambda r: (0, 0)),
                pl.BlockSpec((1, half_pad), lambda r: (0, 0)),
                pl.BlockSpec((half_pad, out_pad), lambda r: (0, 0)),
                pl.BlockSpec((1, out_pad), lambda r: (0, 0)),
            ],
            out_specs=pl.BlockSpec((g_pad, out_pad), lambda r: (0, 0)),
            scratch_shapes=[pltpu.VMEM((g_pad, hid_pad), jnp.float32)],
        ),
        compiler_params=pltpu.CompilerParams(
            dimension_semantics=("arbitrary",),
            vmem_limit_bytes=vmem_limit,
        ),
    )(p_p, h3, wc1, bc1, wc2, bc2)


# --------------------------------- wrapper -----------------------------------

def _pick_row_tile(n_pad, tm_max=1024):
    # Prefer the largest row tile that still leaves >= 2 row blocks so the
    # "parallel" axis can feed v7x's second TensorCore.
    for tm in (1024, 512, 256):
        if tm <= tm_max and n_pad % tm == 0 and n_pad // tm >= 2:
            return tm
    return min(256, n_pad)


def improved_image_gcn_forward(a_hat, x, params, pool_mat, *,
                               compute_dtype=jnp.bfloat16, path="auto"):
    """ImprovedImageGCN forward on TPU via Pallas.

    compute_dtype: dtype of A_hat / activations / GCN weights fed to the MXU
      (bf16 = performance path, f32 = strict-check path).  Accumulation is
      always f32; bias-add / ReLU / pooling / classifier stay in f32.
    path: "auto" | "fused" | "tiled".
    """
    num_nodes = x.shape[0]
    num_graphs = pool_mat.shape[0]
    out_dim = params["wc2"].shape[1]
    vmem_limit = _vmem_limit_bytes()

    n_pad = _round_up(num_nodes, _N_ALIGN)
    g_pad = _round_up(num_graphs, 8)
    fin_pad = _round_up(x.shape[1], _LANE)
    hid_pad = _round_up(params["w1"].shape[1], _LANE)
    half_pad = _round_up(params["wc1"].shape[1], _LANE)
    out_pad = _round_up(out_dim, _LANE)

    # Zero-padded, lane-dense operands (padding is mathematically inert).
    a_p = _pad2d(a_hat, n_pad, n_pad).astype(compute_dtype)
    h0 = _pad2d(x, n_pad, fin_pad).astype(compute_dtype)
    p_p = _pad2d(pool_mat, g_pad, n_pad).astype(jnp.float32)

    w1 = _pad2d(params["w1"], fin_pad, hid_pad).astype(compute_dtype)
    w2 = _pad2d(params["w2"], hid_pad, hid_pad).astype(compute_dtype)
    w3 = _pad2d(params["w3"], hid_pad, hid_pad).astype(compute_dtype)
    b1 = _pad2d(params["b1"], 1, hid_pad).astype(jnp.float32)
    b2 = _pad2d(params["b2"], 1, hid_pad).astype(jnp.float32)
    b3 = _pad2d(params["b3"], 1, hid_pad).astype(jnp.float32)
    wc1 = _pad2d(params["wc1"], hid_pad, half_pad).astype(jnp.float32)
    bc1 = _pad2d(params["bc1"], 1, half_pad).astype(jnp.float32)
    wc2 = _pad2d(params["wc2"], half_pad, out_pad).astype(jnp.float32)
    bc2 = _pad2d(params["bc2"], 1, out_pad).astype(jnp.float32)

    a_bytes = a_p.size * jnp.dtype(compute_dtype).itemsize
    use_fused = (path == "fused") or (
        path == "auto" and n_pad <= 2048 and 4 * a_bytes <= vmem_limit)

    if use_fused:
        # Whole problem fits on-chip: one kernel, A_hat read from HBM once,
        # no intermediate HBM round-trips, no per-launch overhead.
        out = pl.pallas_call(
            _fused_gcn_kernel,
            out_shape=jax.ShapeDtypeStruct((g_pad, out_pad), jnp.float32),
            compiler_params=pltpu.CompilerParams(vmem_limit_bytes=vmem_limit),
        )(a_p, h0, w1, b1, w2, b2, w3, b3, p_p, wc1, bc1, wc2, bc2)
        return out[:num_graphs, :out_dim]

    # Streaming path: one tiled pallas_call per layer ((A @ H) @ W ordering),
    # then a reduction-tiled pool + classifier kernel.
    tm = _pick_row_tile(n_pad)
    tk = _TK
    h1 = _gcn_layer(a_p, h0, w1, b1, apply_relu=True, out_dtype=compute_dtype,
                    tm=tm, tk=tk, vmem_limit=vmem_limit)
    h2 = _gcn_layer(a_p, h1, w2, b2, apply_relu=True, out_dtype=compute_dtype,
                    tm=tm, tk=tk, vmem_limit=vmem_limit)
    h3 = _gcn_layer(a_p, h2, w3, b3, apply_relu=False, out_dtype=compute_dtype,
                    tm=tm, tk=tk, vmem_limit=vmem_limit)

    out = _pool_classifier(p_p, h3, wc1, bc1, wc2, bc2, tk=tk,
                           vmem_limit=vmem_limit)
    return out[:num_graphs, :out_dim]


# ----------------------------- glue (plain JAX) ------------------------------

def build_normalized_adjacency(edge_index, num_nodes):
    """Dense  D^{-1/2} (A + I) D^{-1/2}  (PyG GCNConv default normalization).

    Self-loops are only added where missing (matches add_remaining_self_loops).
    """
    src = edge_index[0]
    dst = edge_index[1]
    a = jnp.zeros((num_nodes, num_nodes), jnp.float32)
    a = a.at[dst, src].add(1.0)                       # message src -> dst
    eye = jnp.eye(num_nodes, dtype=bool)
    a = jnp.where(eye, jnp.maximum(a, 1.0), a)        # add missing self-loops
    deg = jnp.sum(a, axis=1)
    dinv = jnp.where(deg > 0.0, 1.0 / jnp.sqrt(deg), 0.0)
    return dinv[:, None] * a * dinv[None, :]


def build_mean_pool_matrix(batch, num_graphs):
    onehot = (batch[None, :] == jnp.arange(num_graphs)[:, None]).astype(jnp.float32)
    counts = jnp.maximum(jnp.sum(onehot, axis=1, keepdims=True), 1.0)
    return onehot / counts                            # [G, N]


def init_params(key, input_dim, hidden_dim, output_dim=102):
    ks = jax.random.split(key, 10)

    def glorot(k, shape):
        fan_in, fan_out = shape
        scale = jnp.sqrt(6.0 / (fan_in + fan_out))
        return jax.random.uniform(k, shape, jnp.float32, -scale, scale)

    half = hidden_dim // 2
    return {
        "w1": glorot(ks[0], (input_dim, hidden_dim)),
        "b1": 0.01 * jax.random.normal(ks[1], (1, hidden_dim), jnp.float32),
        "w2": glorot(ks[2], (hidden_dim, hidden_dim)),
        "b2": 0.01 * jax.random.normal(ks[3], (1, hidden_dim), jnp.float32),
        "w3": glorot(ks[4], (hidden_dim, hidden_dim)),
        "b3": 0.01 * jax.random.normal(ks[5], (1, hidden_dim), jnp.float32),
        "wc1": glorot(ks[6], (hidden_dim, half)),
        "bc1": 0.01 * jax.random.normal(ks[7], (1, half), jnp.float32),
        "wc2": glorot(ks[8], (half, output_dim)),
        "bc2": 0.01 * jax.random.normal(ks[9], (1, output_dim), jnp.float32),
    }


def reference_forward(a_hat, x, params, pool_mat):
    """Pure-JAX f32 reference (highest matmul precision for a stable check)."""
    with jax.default_matmul_precision("highest"):
        h = jnp.maximum(a_hat @ (x @ params["w1"]) + params["b1"], 0.0)
        h = jnp.maximum(a_hat @ (h @ params["w2"]) + params["b2"], 0.0)
        h = a_hat @ (h @ params["w3"]) + params["b3"]
        g = pool_mat @ h
        g = jnp.maximum(g @ params["wc1"] + params["bc1"], 0.0)
        return g @ params["wc2"] + params["bc2"]


def _make_ring_batch(num_graphs, nodes_per_graph, input_dim, key):
    """Node features + undirected ring edges per graph + batch vector."""
    num_nodes = num_graphs * nodes_per_graph
    x = jax.random.normal(key, (num_nodes, input_dim), jnp.float32)
    srcs, dsts = [], []
    for g in range(num_graphs):
        base = g * nodes_per_graph
        for i in range(nodes_per_graph):
            u = base + i
            v = base + (i + 1) % nodes_per_graph
            srcs += [u, v]
            dsts += [v, u]
    edge_index = jnp.array([srcs, dsts], dtype=jnp.int32)         # [2, E]
    batch = jnp.repeat(jnp.arange(num_graphs, dtype=jnp.int32), nodes_per_graph)
    return x, edge_index, batch


if __name__ == "__main__":
    key = jax.random.PRNGKey(0)
    k_small, k_big, k_p = jax.random.split(key, 3)

    input_dim, hidden_dim, output_dim = 16, 32, 102
    params = init_params(k_p, input_dim, hidden_dim, output_dim)

    # ---- small batch (2 graphs x 96 nodes, N=192 -> n_pad=256): fused path --
    x_s, ei_s, batch_s = _make_ring_batch(2, 96, input_dim, k_small)
    a_s = build_normalized_adjacency(ei_s, x_s.shape[0])
    p_s = build_mean_pool_matrix(batch_s, 2)
    ref_s = reference_forward(a_s, x_s, params, p_s)

    out = improved_image_gcn_forward(a_s, x_s, params, p_s,
                                     compute_dtype=jnp.float32)
    out = jax.block_until_ready(out)
    assert out.shape == (2, output_dim), out.shape
    assert jnp.allclose(out, ref_s, atol=1e-3, rtol=1e-3), "fused f32 mismatch"

    out = improved_image_gcn_forward(a_s, x_s, params, p_s)   # bf16 perf path
    out = jax.block_until_ready(out)
    assert out.shape == (2, output_dim), out.shape
    assert jnp.allclose(out, ref_s, atol=1e-1, rtol=1e-1), "fused bf16 mismatch"

    # ---- larger batch (3 graphs x 300 nodes, N=900 -> n_pad=1024): tiled ----
    x_b, ei_b, batch_b = _make_ring_batch(3, 300, input_dim, k_big)
    a_b = build_normalized_adjacency(ei_b, x_b.shape[0])
    p_b = build_mean_pool_matrix(batch_b, 3)
    ref_b = reference_forward(a_b, x_b, params, p_b)

    out = improved_image_gcn_forward(a_b, x_b, params, p_b,
                                     compute_dtype=jnp.float32, path="tiled")
    out = jax.block_until_ready(out)
    assert out.shape == (3, output_dim), out.shape
    assert jnp.allclose(out, ref_b, atol=1e-3, rtol=1e-3), "tiled f32 mismatch"

    out = improved_image_gcn_forward(a_b, x_b, params, p_b, path="tiled")
    out = jax.block_until_ready(out)
    assert out.shape == (3, output_dim), out.shape
    assert jnp.allclose(out, ref_b, atol=1e-1, rtol=1e-1), "tiled bf16 mismatch"

    print("KERNEL_OK")
</pallas_src>

<mosaic_0001>
module attributes {stable_mosaic.version = 11 : i64} {
  func.func @_fused_gcn_kernel(%arg0: memref<256x256xf32, #tpu.memory_space<vmem>>, %arg1: memref<256x128xf32, #tpu.memory_space<vmem>>, %arg2: memref<128x128xf32, #tpu.memory_space<vmem>>, %arg3: memref<1x128xf32, #tpu.memory_space<vmem>>, %arg4: memref<128x128xf32, #tpu.memory_space<vmem>>, %arg5: memref<1x128xf32, #tpu.memory_space<vmem>>, %arg6: memref<128x128xf32, #tpu.memory_space<vmem>>, %arg7: memref<1x128xf32, #tpu.memory_space<vmem>>, %arg8: memref<8x256xf32, #tpu.memory_space<vmem>>, %arg9: memref<128x128xf32, #tpu.memory_space<vmem>>, %arg10: memref<1x128xf32, #tpu.memory_space<vmem>>, %arg11: memref<128x128xf32, #tpu.memory_space<vmem>>, %arg12: memref<1x128xf32, #tpu.memory_space<vmem>>, %arg13: memref<8x128xf32, #tpu.memory_space<vmem>>) attributes {dimension_semantics = [], scalar_prefetch = 0 : i64, scratch_operands = 0 : i64, tpu.core_type = #tpu.core_type<tc>} {
    %c0 = arith.constant 0 : index
    %c0_0 = arith.constant 0 : index
    %0 = vector.load %arg0[%c0, %c0_0] : memref<256x256xf32, #tpu.memory_space<vmem>>, vector<256x256xf32>
    %c0_1 = arith.constant 0 : index
    %c0_2 = arith.constant 0 : index
    %1 = vector.load %arg1[%c0_1, %c0_2] : memref<256x128xf32, #tpu.memory_space<vmem>>, vector<256x128xf32>
    %cst = arith.constant dense<0.000000e+00> : vector<256x128xf32>
    %2 = tpu.matmul %0, %1, %cst {dimension_numbers = #tpu.dot_dimension_numbers<[1], [0], [0], [1], [0, 0, 1, 1], [], []>} : vector<256x256xf32>, vector<256x128xf32>, vector<256x128xf32> -> vector<256x128xf32>
    %c0_3 = arith.constant 0 : index
    %c0_4 = arith.constant 0 : index
    %3 = vector.load %arg2[%c0_3, %c0_4] : memref<128x128xf32, #tpu.memory_space<vmem>>, vector<128x128xf32>
    %cst_5 = arith.constant dense<0.000000e+00> : vector<256x128xf32>
    %4 = tpu.matmul %2, %3, %cst_5 {dimension_numbers = #tpu.dot_dimension_numbers<[1], [0], [0], [1], [0, 0, 1, 1], [], []>} : vector<256x128xf32>, vector<128x128xf32>, vector<256x128xf32> -> vector<256x128xf32>
    %c0_6 = arith.constant 0 : index
    %c0_7 = arith.constant 0 : index
    %5 = vector.load %arg3[%c0_6, %c0_7] : memref<1x128xf32, #tpu.memory_space<vmem>>, vector<1x128xf32>
    %6 = vector.broadcast %5 : vector<1x128xf32> to vector<256x128xf32>
    %7 = arith.addf %4, %6 : vector<256x128xf32>
    %cst_8 = arith.constant 0.000000e+00 : f32
    %8 = vector.broadcast %cst_8 : f32 to vector<256x128xf32>
    %9 = arith.maximumf %7, %8 : vector<256x128xf32>
    %cst_9 = arith.constant dense<0.000000e+00> : vector<256x128xf32>
    %10 = tpu.matmul %0, %9, %cst_9 {dimension_numbers = #tpu.dot_dimension_numbers<[1], [0], [0], [1], [0, 0, 1, 1], [], []>} : vector<256x256xf32>, vector<256x128xf32>, vector<256x128xf32> -> vector<256x128xf32>
    %c0_10 = arith.constant 0 : index
    %c0_11 = arith.constant 0 : index
    %11 = vector.load %arg4[%c0_10, %c0_11] : memref<128x128xf32, #tpu.memory_space<vmem>>, vector<128x128xf32>
    %cst_12 = arith.constant dense<0.000000e+00> : vector<256x128xf32>
    %12 = tpu.matmul %10, %11, %cst_12 {dimension_numbers = #tpu.dot_dimension_numbers<[1], [0], [0], [1], [0, 0, 1, 1], [], []>} : vector<256x128xf32>, vector<128x128xf32>, vector<256x128xf32> -> vector<256x128xf32>
    %c0_13 = arith.constant 0 : index
    %c0_14 = arith.constant 0 : index
    %13 = vector.load %arg5[%c0_13, %c0_14] : memref<1x128xf32, #tpu.memory_space<vmem>>, vector<1x128xf32>
    %14 = vector.broadcast %13 : vector<1x128xf32> to vector<256x128xf32>
    %15 = arith.addf %12, %14 : vector<256x128xf32>
    %cst_15 = arith.constant 0.000000e+00 : f32
    %16 = vector.broadcast %cst_15 : f32 to vector<256x128xf32>
    %17 = arith.maximumf %15, %16 : vector<256x128xf32>
    %cst_16 = arith.constant dense<0.000000e+00> : vector<256x128xf32>
    %18 = tpu.matmul %0, %17, %cst_16 {dimension_numbers = #tpu.dot_dimension_numbers<[1], [0], [0], [1], [0, 0, 1, 1], [], []>} : vector<256x256xf32>, vector<256x128xf32>, vector<256x128xf32> -> vector<256x128xf32>
    %c0_17 = arith.constant 0 : index
    %c0_18 = arith.constant 0 : index
    %19 = vector.load %arg6[%c0_17, %c0_18] : memref<128x128xf32, #tpu.memory_space<vmem>>, vector<128x128xf32>
    %cst_19 = arith.constant dense<0.000000e+00> : vector<256x128xf32>
    %20 = tpu.matmul %18, %19, %cst_19 {dimension_numbers = #tpu.dot_dimension_numbers<[1], [0], [0], [1], [0, 0, 1, 1], [], []>} : vector<256x128xf32>, vector<128x128xf32>, vector<256x128xf32> -> vector<256x128xf32>
    %c0_20 = arith.constant 0 : index
    %c0_21 = arith.constant 0 : index
    %21 = vector.load %arg7[%c0_20, %c0_21] : memref<1x128xf32, #tpu.memory_space<vmem>>, vector<1x128xf32>
    %22 = vector.broadcast %21 : vector<1x128xf32> to vector<256x128xf32>
    %23 = arith.addf %20, %22 : vector<256x128xf32>
    %c0_22 = arith.constant 0 : index
    %c0_23 = arith.constant 0 : index
    %24 = vector.load %arg8[%c0_22, %c0_23] : memref<8x256xf32, #tpu.memory_space<vmem>>, vector<8x256xf32>
    %cst_24 = arith.constant dense<0.000000e+00> : vector<8x128xf32>
    %25 = tpu.matmul %24, %23, %cst_24 {dimension_numbers = #tpu.dot_dimension_numbers<[1], [0], [0], [1], [0, 0, 1, 1], [], []>} : vector<8x256xf32>, vector<256x128xf32>, vector<8x128xf32> -> vector<8x128xf32>
    %c0_25 = arith.constant 0 : index
    %c0_26 = arith.constant 0 : index
    %26 = vector.load %arg9[%c0_25, %c0_26] : memref<128x128xf32, #tpu.memory_space<vmem>>, vector<128x128xf32>
    %cst_27 = arith.constant dense<0.000000e+00> : vector<8x128xf32>
    %27 = tpu.matmul %25, %26, %cst_27 {dimension_numbers = #tpu.dot_dimension_numbers<[1], [0], [0], [1], [0, 0, 1, 1], [], []>} : vector<8x128xf32>, vector<128x128xf32>, vector<8x128xf32> -> vector<8x128xf32>
    %c0_28 = arith.constant 0 : index
    %c0_29 = arith.constant 0 : index
    %28 = vector.load %arg10[%c0_28, %c0_29] : memref<1x128xf32, #tpu.memory_space<vmem>>, vector<1x128xf32>
    %29 = vector.broadcast %28 : vector<1x128xf32> to vector<8x128xf32>
    %30 = arith.addf %27, %29 : vector<8x128xf32>
    %cst_30 = arith.constant 0.000000e+00 : f32
    %31 = vector.broadcast %cst_30 : f32 to vector<8x128xf32>
    %32 = arith.maximumf %30, %31 : vector<8x128xf32>
    %c0_31 = arith.constant 0 : index
    %c0_32 = arith.constant 0 : index
    %33 = vector.load %arg11[%c0_31, %c0_32] : memref<128x128xf32, #tpu.memory_space<vmem>>, vector<128x128xf32>
    %cst_33 = arith.constant dense<0.000000e+00> : vector<8x128xf32>
    %34 = tpu.matmul %32, %33, %cst_33 {dimension_numbers = #tpu.dot_dimension_numbers<[1], [0], [0], [1], [0, 0, 1, 1], [], []>} : vector<8x128xf32>, vector<128x128xf32>, vector<8x128xf32> -> vector<8x128xf32>
    %c0_34 = arith.constant 0 : index
    %c0_35 = arith.constant 0 : index
    %35 = vector.load %arg12[%c0_34, %c0_35] : memref<1x128xf32, #tpu.memory_space<vmem>>, vector<1x128xf32>
    %36 = vector.broadcast %35 : vector<1x128xf32> to vector<8x128xf32>
    %37 = arith.addf %34, %36 : vector<8x128xf32>
    %c0_36 = arith.constant 0 : index
    %c0_37 = arith.constant 0 : index
    %38 = vector.load %arg13[%c0_36, %c0_37] : memref<8x128xf32, #tpu.memory_space<vmem>>, vector<8x128xf32>
    tpu.vector_store %arg13[%c0_36, %c0_37], %37 {strides = array<i32>} : memref<8x128xf32, #tpu.memory_space<vmem>>, vector<8x128xf32>,
    return
  }
}

</mosaic_0001>

<llo_original>
// kernel: tpu_custom_call.1
$region0: #{tpu_custom_call.1}
  #allocation0 [shape = 'u32[]', space=smem, size = 0x4, offset = 0x4, fixed_abs, tag = 'smem constant byte address 0x4 - core index']
  #allocation1 [shape = 'u32[144,128]{1,0:T(1,128)}', space=vmem, size = 0x12000, scoped, tag = 'internal scratch']
  %s0 = inlined_call_operand.hbm [shape: f32[256,256], index: 0, kind: input, shape index: {}]
  %s1 = inlined_call_operand.hbm [shape: f32[256,128], index: 1, kind: input, shape index: {}]
  %s2 = inlined_call_operand.hbm [shape: f32[128,128], index: 2, kind: input, shape index: {}]
  %s3 = inlined_call_operand.vmem [shape: f32[1,128], index: 3, kind: input, shape index: {}]
  %s4 = inlined_call_operand.hbm [shape: f32[128,128], index: 4, kind: input, shape index: {}]
  %s5 = inlined_call_operand.vmem [shape: f32[1,128], index: 5, kind: input, shape index: {}]
  %s6 = inlined_call_operand.hbm [shape: f32[128,128], index: 6, kind: input, shape index: {}]
  %s7 = inlined_call_operand.vmem [shape: f32[1,128], index: 7, kind: input, shape index: {}]
  %s8 = inlined_call_operand.hbm [shape: f32[8,256], index: 8, kind: input, shape index: {}]
  %s9 = inlined_call_operand.hbm [shape: f32[128,128], index: 9, kind: input, shape index: {}]
  %s10 = inlined_call_operand.vmem [shape: f32[1,128], index: 10, kind: input, shape index: {}]
  %s11 = inlined_call_operand.hbm [shape: f32[128,128], index: 11, kind: input, shape index: {}]
  %s12 = inlined_call_operand.vmem [shape: f32[1,128], index: 12, kind: input, shape index: {}]
  %s13 = inlined_call_operand.hbm [shape: f32[8,128], index: 13, kind: output, shape index: {}]
  %s14 = sld [smem:[#allocation0]]
  $region94: #{tpu_custom_call.1} parent=0
    _
  %s16 = ssub.s32 1, %s14
  %s17 = scalar_select 0, %s16, %s14
  $region1: #{tpu_custom_call.1} parent=0
    #allocation2 [shape = 'u8[262144]{0}', space=vmem, size = 0x40000, scoped, tag = 'input window, operand 0, single buffered']
    #allocation3 [shape = 's32[1]{0}', space=sflag, size = 0x4, scoped, tag = 'scoped memory for tpu_custom_call.1']
    #allocation4 [shape = 's32[1]{0}', space=sflag, size = 0x4, scoped, tag = 'scoped memory for tpu_custom_call.1']
    #allocation5 [shape = 'u8[131072]{0}', space=vmem, size = 0x20000, scoped, tag = 'input window, operand 1, single buffered']
    #allocation6 [shape = 's32[1]{0}', space=sflag, size = 0x4, scoped, tag = 'scoped memory for tpu_custom_call.1']
    #allocation7 [shape = 'u8[65536]{0}', space=vmem, size = 0x10000, scoped, tag = 'input window, operand 2, single buffered']
    #allocation8 [shape = 'u8[65536]{0}', space=vmem, size = 0x10000, scoped, tag = 'input window, operand 4, single buffered']
    #allocation9 [shape = 's32[1]{0}', space=sflag, size = 0x4, scoped, tag = 'scoped memory for tpu_custom_call.1']
    #allocation10 [shape = 'u8[65536]{0}', space=vmem, size = 0x10000, scoped, tag = 'input window, operand 6, single buffered']
    #allocation11 [shape = 'u8[8192]{0}', space=vmem, size = 0x2000, scoped, tag = 'input window, operand 8, single buffered']
    #allocation12 [shape = 's32[1]{0}', space=sflag, size = 0x4, scoped, tag = 'scoped memory for tpu_custom_call.1']
    #allocation13 [shape = 'u8[65536]{0}', space=vmem, size = 0x10000, scoped, tag = 'input window, operand 9, single buffered']
    #allocation14 [shape = 'u8[65536]{0}', space=vmem, size = 0x10000, scoped, tag = 'input window, operand 11, single buffered']
    #allocation15 [shape = 's32[1]{0}', space=sflag, size = 0x4, scoped, tag = 'scoped memory for tpu_custom_call.1']
    #allocation16 [shape = 'u8[4096]{0}', space=vmem, size = 0x1000, scoped, tag = 'output window, operand 0, single buffered']
    %18 = vsyncpa [#allocation3], 0
    %19 = vsyncpa [#allocation6], 0
    %20 = vsyncpa [#allocation9], 0
    %21 = vsyncpa [#allocation12], 0
    %22 = vsyncpa [#allocation15], 0
    %23 = vsyncpa [#allocation4], 0
    // Predicated region
    $region2: #{tpu_custom_call.1} parent=1 // pred_check
      _
    $region3: #{tpu_custom_call.1} parent=1 // pred_check_branch
      %25 = sbr.rel (0) target = $region5
    $region4: #{tpu_custom_call.1} parent=1 // pred_region
      %s27 = ssub.s32 8192, 8192
      %28 = vsyncadd [#allocation3], %s27
      %s29 = sshll.u32 [#allocation2], 4
      %s30 = int_to_ptr.vmem [resolvable:$true] %s29
      %35 = dma.hbm_to_vmem [thread:$0]  %s0, 8192, %s30, [#allocation3], 256, 256, 16
    $region5: #{tpu_custom_call.1} parent=1 // pred_fallthru
      _
    // Predicated region
    $region6: #{tpu_custom_call.1} parent=1 // pred_check
      _
    $region7: #{tpu_custom_call.1} parent=1 // pred_check_branch
      %37 = sbr.rel (0) target = $region9
    $region8: #{tpu_custom_call.1} parent=1 // pred_region
      %s39 = ssub.s32 4096, 4096
      %40 = vsyncadd [#allocation6], %s39
      %s41 = sshll.u32 [#allocation5], 4
      %s42 = int_to_ptr.vmem [resolvable:$true] %s41
      %47 = dma.hbm_to_vmem [thread:$0]  %s1, 4096, %s42, [#allocation6], 128, 128, 8
    $region9: #{tpu_custom_call.1} parent=1 // pred_fallthru
      _
    // Predicated region
    $region10: #{tpu_custom_call.1} parent=1 // pred_check
      _
    $region11: #{tpu_custom_call.1} parent=1 // pred_check_branch
      %49 = sbr.rel (0) target = $region13
    $region12: #{tpu_custom_call.1} parent=1 // pred_region
      %s51 = ssub.s32 2048, 2048
      %52 = vsyncadd [#allocation6], %s51
      %s53 = sshll.u32 [#allocation7], 4
      %s54 = int_to_ptr.vmem [resolvable:$true] %s53
      %59 = dma.hbm_to_vmem [thread:$0]  %s2, 2048, %s54, [#allocation6], 128, 128, 8
    $region13: #{tpu_custom_call.1} parent=1 // pred_fallthru
      _
    // Predicated region
    $region14: #{tpu_custom_call.1} parent=1 // pred_check
      _
    $region15: #{tpu_custom_call.1} parent=1 // pred_check_branch
      %61 = sbr.rel (0) target = $region17
    $region16: #{tpu_custom_call.1} parent=1 // pred_region
      _
    $region17: #{tpu_custom_call.1} parent=1 // pred_fallthru
      _
    // Predicated region
    $region18: #{tpu_custom_call.1} parent=1 // pred_check
      _
    $region19: #{tpu_custom_call.1} parent=1 // pred_check_branch
      %63 = sbr.rel (0) target = $region21
    $region20: #{tpu_custom_call.1} parent=1 // pred_region
      %s65 = ssub.s32 2048, 2048
      %66 = vsyncadd [#allocation9], %s65
      %s67 = sshll.u32 [#allocation8], 4
      %s68 = int_to_ptr.vmem [resolvable:$true] %s67
      %73 = dma.hbm_to_vmem [thread:$0]  %s4, 2048, %s68, [#allocation9], 128, 128, 8
    $region21: #{tpu_custom_call.1} parent=1 // pred_fallthru
      _
    // Predicated region
    $region22: #{tpu_custom_call.1} parent=1 // pred_check
      _
    $region23: #{tpu_custom_call.1} parent=1 // pred_check_branch
      %75 = sbr.rel (0) target = $region25
    $region24: #{tpu_custom_call.1} parent=1 // pred_region
      _
    $region25: #{tpu_custom_call.1} parent=1 // pred_fallthru
      _
    // Predicated region
    $region26: #{tpu_custom_call.1} parent=1 // pred_check
      _
    $region27: #{tpu_custom_call.1} parent=1 // pred_check_branch
      %77 = sbr.rel (0) target = $region29
    $region28: #{tpu_custom_call.1} parent=1 // pred_region
      %s79 = ssub.s32 2048, 2048
      %80 = vsyncadd [#allocation9], %s79
      %s81 = sshll.u32 [#allocation10], 4
      %s82 = int_to_ptr.vmem [resolvable:$true] %s81
      %87 = dma.hbm_to_vmem [thread:$0]  %s6, 2048, %s82, [#allocation9], 128, 128, 8
    $region29: #{tpu_custom_call.1} parent=1 // pred_fallthru
      _
    // Predicated region
    $region30: #{tpu_custom_call.1} parent=1 // pred_check
      _
    $region31: #{tpu_custom_call.1} parent=1 // pred_check_branch
      %89 = sbr.rel (0) target = $region33
    $region32: #{tpu_custom_call.1} parent=1 // pred_region
      _
    $region33: #{tpu_custom_call.1} parent=1 // pred_fallthru
      _
    // Predicated region
    $region34: #{tpu_custom_call.1} parent=1 // pred_check
      _
    $region35: #{tpu_custom_call.1} parent=1 // pred_check_branch
      %91 = sbr.rel (0) target = $region37
    $region36: #{tpu_custom_call.1} parent=1 // pred_region
      %s93 = ssub.s32 256, 256
      %94 = vsyncadd [#allocation12], %s93
      %s96 = sshll.u32 [#allocation11], 4
      %s97 = int_to_ptr.vmem [resolvable:$true] %s96
      %99 = dma.hbm_to_vmem [thread:$0]  %s8, 256, %s97, [#allocation12]
    $region37: #{tpu_custom_call.1} parent=1 // pred_fallthru
      _
    // Predicated region
    $region38: #{tpu_custom_call.1} parent=1 // pred_check
      _
    $region39: #{tpu_custom_call.1} parent=1 // pred_check_branch
      %101 = sbr.rel (0) target = $region41
    $region40: #{tpu_custom_call.1} parent=1 // pred_region
      %s103 = ssub.s32 2048, 2048
      %104 = vsyncadd [#allocation12], %s103
      %s105 = sshll.u32 [#allocation13], 4
      %s106 = int_to_ptr.vmem [resolvable:$true] %s105
      %111 = dma.hbm_to_vmem [thread:$0]  %s9, 2048, %s106, [#allocation12], 128, 128, 8
    $region41: #{tpu_custom_call.1} parent=1 // pred_fallthru
      _
    // Predicated region
    $region42: #{tpu_custom_call.1} parent=1 // pred_check
      _
    $region43: #{tpu_custom_call.1} parent=1 // pred_check_branch
      %113 = sbr.rel (0) target = $region45
    $region44: #{tpu_custom_call.1} parent=1 // pred_region
      _
    $region45: #{tpu_custom_call.1} parent=1 // pred_fallthru
      _
    // Predicated region
    $region46: #{tpu_custom_call.1} parent=1 // pred_check
      _
    $region47: #{tpu_custom_call.1} parent=1 // pred_check_branch
      %115 = sbr.rel (0) target = $region49
    $region48: #{tpu_custom_call.1} parent=1 // pred_region
      %s117 = ssub.s32 2048, 2048
      %118 = vsyncadd [#allocation15], %s117
      %s119 = sshll.u32 [#allocation14], 4
      %s120 = int_to_ptr.vmem [resolvable:$true] %s119
      %125 = dma.hbm_to_vmem [thread:$0]  %s11, 2048, %s120, [#allocation15], 128, 128, 8
    $region49: #{tpu_custom_call.1} parent=1 // pred_fallthru
      _
    // Predicated region
    $region50: #{tpu_custom_call.1} parent=1 // pred_check
      _
    $region51: #{tpu_custom_call.1} parent=1 // pred_check_branch
      %127 = sbr.rel (0) target = $region53
    $region52: #{tpu_custom_call.1} parent=1 // pred_region
      _
    $region53: #{tpu_custom_call.1} parent=1 // pred_fallthru
      _
    // Predicated region
    $region54: #{tpu_custom_call.1} parent=1 // pred_check
      _
    $region55: #{tpu_custom_call.1} parent=1 // pred_check_branch
      %129 = sbr.rel (0) target = $region57
    $region56: #{tpu_custom_call.1} parent=1 // pred_region
      %130 = dma.done [#allocation3], 8192
    $region57: #{tpu_custom_call.1} parent=1 // pred_fallthru
      _
    // Predicated region
    $region58: #{tpu_custom_call.1} parent=1 // pred_check
      _
    $region59: #{tpu_custom_call.1} parent=1 // pred_check_branch
      %132 = sbr.rel (0) target = $region61
    $region60: #{tpu_custom_call.1} parent=1 // pred_region
      %133 = dma.done [#allocation6], 4096
    $region61: #{tpu_custom_call.1} parent=1 // pred_fallthru
      _
    // Predicated region
    $region62: #{tpu_custom_call.1} parent=1 // pred_check
      _
    $region63: #{tpu_custom_call.1} parent=1 // pred_check_branch
      %135 = sbr.rel (0) target = $region65
    $region64: #{tpu_custom_call.1} parent=1 // pred_region
      %136 = dma.done [#allocation6], 2048
    $region65: #{tpu_custom_call.1} parent=1 // pred_fallthru
      _
    // Predicated region
    $region66: #{tpu_custom_call.1} parent=1 // pred_check
      _
    $region67: #{tpu_custom_call.1} parent=1 // pred_check_branch
      %138 = sbr.rel (0) target = $region69
    $region68: #{tpu_custom_call.1} parent=1 // pred_region
      %139 = dma.done [#allocation9], 2048
    $region69: #{tpu_custom_call.1} parent=1 // pred_fallthru
      _
    // Predicated region
    $region70: #{tpu_custom_call.1} parent=1 // pred_check
      _
    $region71: #{tpu_custom_call.1} parent=1 // pred_check_branch
      %141 = sbr.rel (0) target = $region73
    $region72: #{tpu_custom_call.1} parent=1 // pred_region
      %142 = dma.done [#allocation9], 2048
    $region73: #{tpu_custom_call.1} parent=1 // pred_fallthru
      _
    // Predicated region
    $region74: #{tpu_custom_call.1} parent=1 // pred_check
      _
    $region75: #{tpu_custom_call.1} parent=1 // pred_check_branch
      %144 = sbr.rel (0) target = $region77
    $region76: #{tpu_custom_call.1} parent=1 // pred_region
      %145 = dma.done [#allocation12], 256
    $region77: #{tpu_custom_call.1} parent=1 // pred_fallthru
      _
    // Predicated region
    $region78: #{tpu_custom_call.1} parent=1 // pred_check
      _
    $region79: #{tpu_custom_call.1} parent=1 // pred_check_branch
      %147 = sbr.rel (0) target = $region81
    $region80: #{tpu_custom_call.1} parent=1 // pred_region
      %148 = dma.done [#allocation12], 2048
    $region81: #{tpu_custom_call.1} parent=1 // pred_fallthru
      _
    // Predicated region
    $region82: #{tpu_custom_call.1} parent=1 // pred_check
      _
    $region83: #{tpu_custom_call.1} parent=1 // pred_check_branch
      %150 = sbr.rel (0) target = $region85
    $region84: #{tpu_custom_call.1} parent=1 // pred_region
      %151 = dma.done [#allocation15], 2048
    $region85: #{tpu_custom_call.1} parent=1 // pred_fallthru
      _
    %v152 = vld [vmem:[#allocation2] sm:$0xff]
    %v153 = vld [vmem:[#allocation2 + $0x8] sm:$0xff]
    %v154 = vld [vmem:[#allocation2 + $0x10] sm:$0xff]
    %v155 = vld [vmem:[#allocation2 + $0x18] sm:$0xff]
    %v156 = vld [vmem:[#allocation2 + $0x20] sm:$0xff]
    %v157 = vld [vmem:[#allocation2 + $0x28] sm:$0xff]
    %v158 = vld [vmem:[#allocation2 + $0x30] sm:$0xff]
    %v159 = vld [vmem:[#allocation2 + $0x38] sm:$0xff]
    %v160 = vld [vmem:[#allocation2 + $0x40] sm:$0xff]
    %v161 = vld [vmem:[#allocation2 + $0x48] sm:$0xff]
    %v162 = vld [vmem:[#allocation2 + $0x50] sm:$0xff]
    %v163 = vld [vmem:[#allocation2 + $0x58] sm:$0xff]
    %v164 = vld [vmem:[#allocation2 + $0x60] sm:$0xff]
    %v165 = vld [vmem:[#allocation2 + $0x68] sm:$0xff]
    %v166 = vld [vmem:[#allocation2 + $0x70] sm:$0xff]
    %v167 = vld [vmem:[#allocation2 + $0x78] sm:$0xff]
    %v168 = vld [vmem:[#allocation2 + $0x80] sm:$0xff]
    %v169 = vld [vmem:[#allocation2 + $0x88] sm:$0xff]
    %v170 = vld [vmem:[#allocation2 + $0x90] sm:$0xff]
    %v171 = vld [vmem:[#allocation2 + $0x98] sm:$0xff]
    %v172 = vld [vmem:[#allocation2 + $0xa0] sm:$0xff]
    %v173 = vld [vmem:[#allocation2 + $0xa8] sm:$0xff]
    %v174 = vld [vmem:[#allocation2 + $0xb0] sm:$0xff]
    %v175 = vld [vmem:[#allocation2 + $0xb8] sm:$0xff]
    %v176 = vld [vmem:[#allocation2 + $0xc0] sm:$0xff]
    %v177 = vld [vmem:[#allocation2 + $0xc8] sm:$0xff]
    %v178 = vld [vmem:[#allocation2 + $0xd0] sm:$0xff]
    %v179 = vld [vmem:[#allocation2 + $0xd8] sm:$0xff]
    %v180 = vld [vmem:[#allocation2 + $0xe0] sm:$0xff]
    %v181 = vld [vmem:[#allocation2 + $0xe8] sm:$0xff]
    %v182 = vld [vmem:[#allocation2 + $0xf0] sm:$0xff]
    %v183 = vld [vmem:[#allocation2 + $0xf8] sm:$0xff]
    %v184 = vld [vmem:[#allocation2 + $0x100] sm:$0xff]
    %v185 = vld [vmem:[#allocation2 + $0x108] sm:$0xff]
    %v186 = vld [vmem:[#allocation2 + $0x110] sm:$0xff]
    %v187 = vld [vmem:[#allocation2 + $0x118] sm:$0xff]
    %v188 = vld [vmem:[#allocation2 + $0x120] sm:$0xff]
    %v189 = vld [vmem:[#allocation2 + $0x128] sm:$0xff]
    %v190 = vld [vmem:[#allocation2 + $0x130] sm:$0xff]
    %v191 = vld [vmem:[#allocation2 + $0x138] sm:$0xff]
    %v192 = vld [vmem:[#allocation2 + $0x140] sm:$0xff]
    %v193 = vld [vmem:[#allocation2 + $0x148] sm:$0xff]
    %v194 = vld [vmem:[#allocation2 + $0x150] sm:$0xff]
    %v195 = vld [vmem:[#allocation2 + $0x158] sm:$0xff]
    %v196 = vld [vmem:[#allocation2 + $0x160] sm:$0xff]
    %v197 = vld [vmem:[#allocation2 + $0x168] sm:$0xff]
    %v198 = vld [vmem:[#allocation2 + $0x170] sm:$0xff]
    %v199 = vld [vmem:[#allocation2 + $0x178] sm:$0xff]
    %v200 = vld [vmem:[#allocation2 + $0x180] sm:$0xff]
    %v201 = vld [vmem:[#allocation2 + $0x188] sm:$0xff]
    %v202 = vld [vmem:[#allocation2 + $0x190] sm:$0xff]
    %v203 = vld [vmem:[#allocation2 + $0x198] sm:$0xff]
    %v204 = vld [vmem:[#allocation2 + $0x1a0] sm:$0xff]
    %v205 = vld [vmem:[#allocation2 + $0x1a8] sm:$0xff]
    %v206 = vld [vmem:[#allocation2 + $0x1b0] sm:$0xff]
    %v207 = vld [vmem:[#allocation2 + $0x1b8] sm:$0xff]
    %v208 = vld [vmem:[#allocation2 + $0x1c0] sm:$0xff]
    %v209 = vld [vmem:[#allocation2 + $0x1c8] sm:$0xff]
    %v210 = vld [vmem:[#allocation2 + $0x1d0] sm:$0xff]
    %v211 = vld [vmem:[#allocation2 + $0x1d8] sm:$0xff]
    %v212 = vld [vmem:[#allocation2 + $0x1e0] sm:$0xff]
    %v213 = vld [vmem:[#allocation2 + $0x1e8] sm:$0xff]
    %v214 = vld [vmem:[#allocation2 + $0x1f0] sm:$0xff]
    %v215 = vld [vmem:[#allocation2 + $0x1f8] sm:$0xff]
    %v216 = vld [vmem:[#allocation5] sm:$0xff]
    %v217 = vld [vmem:[#allocation5 + $0x8] sm:$0xff]
    %v218 = vld [vmem:[#allocation5 + $0x10] sm:$0xff]
    %v219 = vld [vmem:[#allocation5 + $0x18] sm:$0xff]
    %v220 = vld [vmem:[#allocation5 + $0x20] sm:$0xff]
    %v221 = vld [vmem:[#allocation5 + $0x28] sm:$0xff]
    %v222 = vld [vmem:[#allocation5 + $0x30] sm:$0xff]
    %v223 = vld [vmem:[#allocation5 + $0x38] sm:$0xff]
    %v224 = vld [vmem:[#allocation5 + $0x40] sm:$0xff]
    %v225 = vld [vmem:[#allocation5 + $0x48] sm:$0xff]
    %v226 = vld [vmem:[#allocation5 + $0x50] sm:$0xff]
    %v227 = vld [vmem:[#allocation5 + $0x58] sm:$0xff]
    %v228 = vld [vmem:[#allocation5 + $0x60] sm:$0xff]
    %v229 = vld [vmem:[#allocation5 + $0x68] sm:$0xff]
    %v230 = vld [vmem:[#allocation5 + $0x70] sm:$0xff]
    %v231 = vld [vmem:[#allocation5 + $0x78] sm:$0xff]
    %v232 = vld [vmem:[#allocation5 + $0x80] sm:$0xff]
    %v233 = vld [vmem:[#allocation5 + $0x88] sm:$0xff]
    %v234 = vld [vmem:[#allocation5 + $0x90] sm:$0xff]
    %v235 = vld [vmem:[#allocation5 + $0x98] sm:$0xff]
    %v236 = vld [vmem:[#allocation5 + $0xa0] sm:$0xff]
    %v237 = vld [vmem:[#allocation5 + $0xa8] sm:$0xff]
    %v238 = vld [vmem:[#allocation5 + $0xb0] sm:$0xff]
    %v239 = vld [vmem:[#allocation5 + $0xb8] sm:$0xff]
    %v240 = vld [vmem:[#allocation5 + $0xc0] sm:$0xff]
    %v241 = vld [vmem:[#allocation5 + $0xc8] sm:$0xff]
    %v242 = vld [vmem:[#allocation5 + $0xd0] sm:$0xff]
    %v243 = vld [vmem:[#allocation5 + $0xd8] sm:$0xff]
    %v244 = vld [vmem:[#allocation5 + $0xe0] sm:$0xff]
    %v245 = vld [vmem:[#allocation5 + $0xe8] sm:$0xff]
    %v246 = vld [vmem:[#allocation5 + $0xf0] sm:$0xff]
    %v247 = vld [vmem:[#allocation5 + $0xf8] sm:$0xff]
    %248 = vmatprep.subr.mxu0 0.0
    %249 = vmatpush1.msra.mxu0 %v231
    %250 = vmatprep.subr.mxu0 0.0
    %251 = vmatpush1.msra.mxu0 %v230
    %252 = vmatprep.subr.mxu0 0.0
    %253 = vmatpush1.msra.mxu0 %v229
    %254 = vmatprep.subr.mxu0 0.0
    %255 = vmatpush1.msra.mxu0 %v228
    %256 = vmatprep.subr.mxu0 0.0
    %257 = vmatpush1.msra.mxu0 %v227
    %258 = vmatprep.subr.mxu0 0.0
    %259 = vmatpush1.msra.mxu0 %v226
    %260 = vmatprep.subr.mxu0 0.0
    %261 = vmatpush1.msra.mxu0 %v225
    %262 = vmatprep.subr.mxu0 0.0
    %263 = vmatpush1.msra.mxu0 %v224
    %264 = vmatprep.subr.mxu0 0.0
    %265 = vmatpush1.msra.mxu0 %v223
    %266 = vmatprep.subr.mxu0 0.0
    %267 = vmatpush1.msra.mxu0 %v222
    %268 = vmatprep.subr.mxu0 0.0
    %269 = vmatpush1.msra.mxu0 %v221
    %270 = vmatprep.subr.mxu0 0.0
    %271 = vmatpush1.msra.mxu0 %v220
    %272 = vmatprep.subr.mxu0 0.0
    %273 = vmatpush1.msra.mxu0 %v219
    %274 = vmatprep.subr.mxu0 0.0
    %275 = vmatpush1.msra.mxu0 %v218
    %276 = vmatprep.subr.mxu0 0.0
    %277 = vmatpush1.msra.mxu0 %v217
    %278 = vmatprep.subr.mxu0 0.0
    %279 = vmatpush1.msra.mxu0 %v216
    %280 = vmatprep.subr.mxu0 0.0
    %281 = vmatpush2.msra.mxu0 %v247
    %282 = vmatprep.subr.mxu0 0.0
    %283 = vmatpush2.msra.mxu0 %v246
    %284 = vmatprep.subr.mxu0 0.0
    %285 = vmatpush2.msra.mxu0 %v245
    %286 = vmatprep.subr.mxu0 0.0
    %287 = vmatpush2.msra.mxu0 %v244
    %288 = vmatprep.subr.mxu0 0.0
    %289 = vmatpush2.msra.mxu0 %v243
    %290 = vmatprep.subr.mxu0 0.0
    %291 = vmatpush2.msra.mxu0 %v242
    %292 = vmatprep.subr.mxu0 0.0
    %293 = vmatpush2.msra.mxu0 %v241
    %294 = vmatprep.subr.mxu0 0.0
    %295 = vmatpush2.msra.mxu0 %v240
    %296 = vmatprep.subr.mxu0 0.0
    %297 = vmatpush2.msra.mxu0 %v239
    %298 = vmatprep.subr.mxu0 0.0
    %299 = vmatpush2.msra.mxu0 %v238
    %300 = vmatprep.subr.mxu0 0.0
    %301 = vmatpush2.msra.mxu0 %v237
    %302 = vmatprep.subr.mxu0 0.0
    %303 = vmatpush2.msra.mxu0 %v236
    %304 = vmatprep.subr.mxu0 0.0
    %305 = vmatpush2.msra.mxu0 %v235
    %306 = vmatprep.subr.mxu0 0.0
    %307 = vmatpush2.msra.mxu0 %v234
    %308 = vmatprep.subr.mxu0 0.0
    %309 = vmatpush2.msra.mxu0 %v233
    %310 = vmatprep.subr.mxu0 0.0
    %311 = vmatpush2.msra.mxu0 %v232
    %312 = vmatprep.mubr.f32.mxu0 %v153
    %313 = vmatmul.mubr.f32.gmra.mxu0 %v152
    %v314 = vpop.f32.mrf.mxu0
    %v315 = vadd.f32 0.0, %v314
    %v316 = vpop.f32.mrf.mxu0
    %317 = vmatprep.mubr.f32.mxu0 %v155
    %318 = vmatmul.mubr.f32.gmra.mxu0 %v154
    %v319 = vpop.f32.mrf.mxu0
    %v320 = vadd.f32 0.0, %v319
    %v321 = vpop.f32.mrf.mxu0
    %322 = vmatprep.mubr.f32.mxu0 %v157
    %323 = vmatmul.mubr.f32.gmra.mxu0 %v156
    %v324 = vpop.f32.mrf.mxu0
    %v325 = vadd.f32 0.0, %v324
    %v326 = vpop.f32.mrf.mxu0
    %327 = vmatprep.mubr.f32.mxu0 %v159
    %328 = vmatmul.mubr.f32.gmra.mxu0 %v158
    %v329 = vpop.f32.mrf.mxu0
    %v330 = vadd.f32 0.0, %v329
    %v331 = vpop.f32.mrf.mxu0
    %332 = vmatprep.mubr.f32.mxu0 %v161
    %333 = vmatmul.mubr.f32.gmra.mxu0 %v160
    %v334 = vpop.f32.mrf.mxu0
    %v335 = vadd.f32 0.0, %v334
    %v336 = vpop.f32.mrf.mxu0
    %337 = vmatprep.mubr.f32.mxu0 %v163
    %338 = vmatmul.mubr.f32.gmra.mxu0 %v162
    %v339 = vpop.f32.mrf.mxu0
    %v340 = vadd.f32 0.0, %v339
    %v341 = vpop.f32.mrf.mxu0
    %342 = vmatprep.mubr.f32.mxu0 %v165
    %343 = vmatmul.mubr.f32.gmra.mxu0 %v164
    %v344 = vpop.f32.mrf.mxu0
    %v345 = vadd.f32 0.0, %v344
    %v346 = vpop.f32.mrf.mxu0
    %347 = vmatprep.mubr.f32.mxu0 %v167
    %348 = vmatmul.mubr.f32.gmra.mxu0 %v166
    %v349 = vpop.f32.mrf.mxu0
    %v350 = vadd.f32 0.0, %v349
    %v351 = vpop.f32.mrf.mxu0
    %352 = vmatprep.mubr.f32.mxu0 %v169
    %353 = vmatmul.mubr.f32.gmra.mxu0 %v168
    %v354 = vpop.f32.mrf.mxu0
    %v355 = vadd.f32 0.0, %v354
    %v356 = vpop.f32.mrf.mxu0
    %357 = vmatprep.mubr.f32.mxu0 %v171
    %358 = vmatmul.mubr.f32.gmra.mxu0 %v170
    %v359 = vpop.f32.mrf.mxu0
    %v360 = vadd.f32 0.0, %v359
    %v361 = vpop.f32.mrf.mxu0
    %362 = vmatprep.mubr.f32.mxu0 %v173
    %363 = vmatmul.mubr.f32.gmra.mxu0 %v172
    %v364 = vpop.f32.mrf.mxu0
    %v365 = vadd.f32 0.0, %v364
    %v366 = vpop.f32.mrf.mxu0
    %367 = vmatprep.mubr.f32.mxu0 %v175
    %368 = vmatmul.mubr.f32.gmra.mxu0 %v174
    %v369 = vpop.f32.mrf.mxu0
    %v370 = vadd.f32 0.0, %v369
    %v371 = vpop.f32.mrf.mxu0
    %372 = vmatprep.mubr.f32.mxu0 %v177
    %373 = vmatmul.mubr.f32.gmra.mxu0 %v176
    %v374 = vpop.f32.mrf.mxu0
    %v375 = vadd.f32 0.0, %v374
    %v376 = vpop.f32.mrf.mxu0
    %377 = vmatprep.mubr.f32.mxu0 %v179
    %378 = vmatmul.mubr.f32.gmra.mxu0 %v178
    %v379 = vpop.f32.mrf.mxu0
    %v380 = vadd.f32 0.0, %v379
    %v381 = vpop.f32.mrf.mxu0
    %382 = vmatprep.mubr.f32.mxu0 %v181
    %383 = vmatmul.mubr.f32.gmra.mxu0 %v180
    %v384 = vpop.f32.mrf.mxu0
    %v385 = vadd.f32 0.0, %v384
    %v386 = vpop.f32.mrf.mxu0
    %387 = vmatprep.mubr.f32.mxu0 %v183
    %388 = vmatmul.mubr.f32.gmra.mxu0 %v182
    %v389 = vpop.f32.mrf.mxu0
    %v390 = vadd.f32 0.0, %v389
    %v391 = vpop.f32.mrf.mxu0
    %392 = vmatprep.mubr.f32.mxu0 %v185
    %393 = vmatmul.mubr.f32.gmra.mxu0 %v184
    %v394 = vpop.f32.mrf.mxu0
    %v395 = vadd.f32 0.0, %v394
    %v396 = vpop.f32.mrf.mxu0
    %397 = vmatprep.mubr.f32.mxu0 %v187
    %398 = vmatmul.mubr.f32.gmra.mxu0 %v186
    %v399 = vpop.f32.mrf.mxu0
    %v400 = vadd.f32 0.0, %v399
    %v401 = vpop.f32.mrf.mxu0
    %402 = vmatprep.mubr.f32.mxu0 %v189
    %403 = vmatmul.mubr.f32.gmra.mxu0 %v188
    %v404 = vpop.f32.mrf.mxu0
    %v405 = vadd.f32 0.0, %v404
    %v406 = vpop.f32.mrf.mxu0
    %407 = vmatprep.mubr.f32.mxu0 %v191
    %408 = vmatmul.mubr.f32.gmra.mxu0 %v190
    %v409 = vpop.f32.mrf.mxu0
    %v410 = vadd.f32 0.0, %v409
    %v411 = vpop.f32.mrf.mxu0
    %412 = vmatprep.mubr.f32.mxu0 %v193
    %413 = vmatmul.mubr.f32.gmra.mxu0 %v192
    %v414 = vpop.f32.mrf.mxu0
    %v415 = vadd.f32 0.0, %v414
    %v416 = vpop.f32.mrf.mxu0
    %417 = vmatprep.mubr.f32.mxu0 %v195
    %418 = vmatmul.mubr.f32.gmra.mxu0 %v194
    %v419 = vpop.f32.mrf.mxu0
    %v420 = vadd.f32 0.0, %v419
    %v421 = vpop.f32.mrf.mxu0
    %422 = vmatprep.mubr.f32.mxu0 %v197
    %423 = vmatmul.mubr.f32.gmra.mxu0 %v196
    %v424 = vpop.f32.mrf.mxu0
    %v425 = vadd.f32 0.0, %v424
    %v426 = vpop.f32.mrf.mxu0
    %427 = vmatprep.mubr.f32.mxu0 %v199
    %428 = vmatmul.mubr.f32.gmra.mxu0 %v198
    %v429 = vpop.f32.mrf.mxu0
    %v430 = vadd.f32 0.0, %v429
    %v431 = vpop.f32.mrf.mxu0
    %432 = vmatprep.mubr.f32.mxu0 %v201
    %433 = vmatmul.mubr.f32.gmra.mxu0 %v200
    %v434 = vpop.f32.mrf.mxu0
    %v435 = vadd.f32 0.0, %v434
    %v436 = vpop.f32.mrf.mxu0
    %437 = vmatprep.mubr.f32.mxu0 %v203
    %438 = vmatmul.mubr.f32.gmra.mxu0 %v202
    %v439 = vpop.f32.mrf.mxu0
    %v440 = vadd.f32 0.0, %v439
    %v441 = vpop.f32.mrf.mxu0
    %442 = vmatprep.mubr.f32.mxu0 %v205
    %443 = vmatmul.mubr.f32.gmra.mxu0 %v204
    %v444 = vpop.f32.mrf.mxu0
    %v445 = vadd.f32 0.0, %v444
    %v446 = vpop.f32.mrf.mxu0
    %447 = vmatprep.mubr.f32.mxu0 %v207
    %448 = vmatmul.mubr.f32.gmra.mxu0 %v206
    %v449 = vpop.f32.mrf.mxu0
    %v450 = vadd.f32 0.0, %v449
    %v451 = vpop.f32.mrf.mxu0
    %452 = vmatprep.mubr.f32.mxu0 %v209
    %453 = vmatmul.mubr.f32.gmra.mxu0 %v208
    %v454 = vpop.f32.mrf.mxu0
    %v455 = vadd.f32 0.0, %v454
    %v456 = vpop.f32.mrf.mxu0
    %457 = vmatprep.mubr.f32.mxu0 %v211
    %458 = vmatmul.mubr.f32.gmra.mxu0 %v210
    %v459 = vpop.f32.mrf.mxu0
    %v460 = vadd.f32 0.0, %v459
    %v461 = vpop.f32.mrf.mxu0
    %462 = vmatprep.mubr.f32.mxu0 %v213
    %463 = vmatmul.mubr.f32.gmra.mxu0 %v212
    %v464 = vpop.f32.mrf.mxu0
    %v465 = vadd.f32 0.0, %v464
    %v466 = vpop.f32.mrf.mxu0
    %467 = vmatprep.mubr.f32.mxu0 %v215
    %468 = vmatmul.mubr.f32.gmra.mxu0 %v214
    %v469 = vpop.f32.mrf.mxu0
    %v470 = vadd.f32 0.0, %v469
    %v471 = vpop.f32.mrf.mxu0
    %472 = vdwg.mxu0
    %v473 = vld [vmem:[#allocation7] sm:$0xff]
    %v474 = vld [vmem:[#allocation7 + $0x8] sm:$0xff]
    %v475 = vld [vmem:[#allocation7 + $0x10] sm:$0xff]
    %v476 = vld [vmem:[#allocation7 + $0x18] sm:$0xff]
    %v477 = vld [vmem:[#allocation7 + $0x20] sm:$0xff]
    %v478 = vld [vmem:[#allocation7 + $0x28] sm:$0xff]
    %v479 = vld [vmem:[#allocation7 + $0x30] sm:$0xff]
    %v480 = vld [vmem:[#allocation7 + $0x38] sm:$0xff]
    %v481 = vld [vmem:[#allocation7 + $0x40] sm:$0xff]
    %v482 = vld [vmem:[#allocation7 + $0x48] sm:$0xff]
    %v483 = vld [vmem:[#allocation7 + $0x50] sm:$0xff]
    %v484 = vld [vmem:[#allocation7 + $0x58] sm:$0xff]
    %v485 = vld [vmem:[#allocation7 + $0x60] sm:$0xff]
    %v486 = vld [vmem:[#allocation7 + $0x68] sm:$0xff]
    %v487 = vld [vmem:[#allocation7 + $0x70] sm:$0xff]
    %v488 = vld [vmem:[#allocation7 + $0x78] sm:$0xff]
    %v489 = vld [vmem:[%s3] sm:$0x1]
    %v491 = vlaneseq
    %v492 = vshrl.u32 %v491, 7
    %v493 = vsub.s32 0, %v492
    %v494 = vrot.slane %v489, %v493
    %496 = vmatprep.subr.mxu0 0.0
    %497 = vmatpush1.msra.mxu0 %v488
    %498 = vmatprep.subr.mxu0 0.0
    %499 = vmatpush1.msra.mxu0 %v487
    %500 = vmatprep.subr.mxu0 0.0
    %501 = vmatpush1.msra.mxu0 %v486
    %502 = vmatprep.subr.mxu0 0.0
    %503 = vmatpush1.msra.mxu0 %v485
    %504 = vmatprep.subr.mxu0 0.0
    %505 = vmatpush1.msra.mxu0 %v484
    %506 = vmatprep.subr.mxu0 0.0
    %507 = vmatpush1.msra.mxu0 %v483
    %508 = vmatprep.subr.mxu0 0.0
    %509 = vmatpush1.msra.mxu0 %v482
    %510 = vmatprep.subr.mxu0 0.0
    %511 = vmatpush1.msra.mxu0 %v481
    %512 = vmatprep.subr.mxu0 0.0
    %513 = vmatpush1.msra.mxu0 %v480
    %514 = vmatprep.subr.mxu0 0.0
    %515 = vmatpush1.msra.mxu0 %v479
    %516 = vmatprep.subr.mxu0 0.0
    %517 = vmatpush1.msra.mxu0 %v478
    %518 = vmatprep.subr.mxu0 0.0
    %519 = vmatpush1.msra.mxu0 %v477
    %520 = vmatprep.subr.mxu0 0.0
    %521 = vmatpush1.msra.mxu0 %v476
    %522 = vmatprep.subr.mxu0 0.0
    %523 = vmatpush1.msra.mxu0 %v475
    %524 = vmatprep.subr.mxu0 0.0
    %525 = vmatpush1.msra.mxu0 %v474
    %526 = vmatprep.subr.mxu0 0.0
    %527 = vmatpush1.msra.mxu0 %v473
    %528 = vmatprep.subr.mxu0 0.0
    %529 = vmatpush2.msra.mxu0 0.0
    %530 = vmatprep.subr.mxu0 0.0
    %531 = vmatpush2.msra.mxu0 0.0
    %532 = vmatprep.subr.mxu0 0.0
    %533 = vmatpush2.msra.mxu0 0.0
    %534 = vmatprep.subr.mxu0 0.0
    %535 = vmatpush2.msra.mxu0 0.0
    %536 = vmatprep.subr.mxu0 0.0
    %537 = vmatpush2.msra.mxu0 0.0
    %538 = vmatprep.subr.mxu0 0.0
    %539 = vmatpush2.msra.mxu0 0.0
    %540 = vmatprep.subr.mxu0 0.0
    %541 = vmatpush2.msra.mxu0 0.0
    %542 = vmatprep.subr.mxu0 0.0
    %543 = vmatpush2.msra.mxu0 0.0
    %544 = vmatprep.subr.mxu0 0.0
    %545 = vmatpush2.msra.mxu0 0.0
    %546 = vmatprep.subr.mxu0 0.0
    %547 = vmatpush2.msra.mxu0 0.0
    %548 = vmatprep.subr.mxu0 0.0
    %549 = vmatpush2.msra.mxu0 0.0
    %550 = vmatprep.subr.mxu0 0.0
    %551 = vmatpush2.msra.mxu0 0.0
    %552 = vmatprep.subr.mxu0 0.0
    %553 = vmatpush2.msra.mxu0 0.0
    %554 = vmatprep.subr.mxu0 0.0
    %555 = vmatpush2.msra.mxu0 0.0
    %556 = vmatprep.subr.mxu0 0.0
    %557 = vmatpush2.msra.mxu0 0.0
    %558 = vmatprep.subr.mxu0 0.0
    %559 = vmatpush2.msra.mxu0 0.0
    %560 = vmatprep.mubr.f32.mxu0 0.0
    %561 = vmatmul.mubr.f32.gmra.mxu0 %v315
    %v562 = vpop.f32.mrf.mxu0
    %v563 = vadd.f32 %v494, %v562
    %v564 = vpop.f32.mrf.mxu0
    %565 = vmatprep.mubr.f32.mxu0 0.0
    %566 = vmatmul.mubr.f32.gmra.mxu0 %v320
    %v567 = vpop.f32.mrf.mxu0
    %v568 = vadd.f32 %v494, %v567
    %v569 = vpop.f32.mrf.mxu0
    %570 = vmatprep.mubr.f32.mxu0 0.0
    %571 = vmatmul.mubr.f32.gmra.mxu0 %v325
    %v572 = vpop.f32.mrf.mxu0
    %v573 = vadd.f32 %v494, %v572
    %v574 = vpop.f32.mrf.mxu0
    %575 = vmatprep.mubr.f32.mxu0 0.0
    %576 = vmatmul.mubr.f32.gmra.mxu0 %v330
    %v577 = vpop.f32.mrf.mxu0
    %v578 = vadd.f32 %v494, %v577
    %v579 = vpop.f32.mrf.mxu0
    %580 = vmatprep.mubr.f32.mxu0 0.0
    %581 = vmatmul.mubr.f32.gmra.mxu0 %v335
    %v582 = vpop.f32.mrf.mxu0
    %v583 = vadd.f32 %v494, %v582
    %v584 = vpop.f32.mrf.mxu0
    %585 = vmatprep.mubr.f32.mxu0 0.0
    %586 = vmatmul.mubr.f32.gmra.mxu0 %v340
    %v587 = vpop.f32.mrf.mxu0
    %v588 = vadd.f32 %v494, %v587
    %v589 = vpop.f32.mrf.mxu0
    %590 = vmatprep.mubr.f32.mxu0 0.0
    %591 = vmatmul.mubr.f32.gmra.mxu0 %v345
    %v592 = vpop.f32.mrf.mxu0
    %v593 = vadd.f32 %v494, %v592
    %v594 = vpop.f32.mrf.mxu0
    %595 = vmatprep.mubr.f32.mxu0 0.0
    %596 = vmatmul.mubr.f32.gmra.mxu0 %v350
    %v597 = vpop.f32.mrf.mxu0
    %v598 = vadd.f32 %v494, %v597
    %v599 = vpop.f32.mrf.mxu0
    %600 = vmatprep.mubr.f32.mxu0 0.0
    %601 = vmatmul.mubr.f32.gmra.mxu0 %v355
    %v602 = vpop.f32.mrf.mxu0
    %v603 = vadd.f32 %v494, %v602
    %v604 = vpop.f32.mrf.mxu0
    %605 = vmatprep.mubr.f32.mxu0 0.0
    %606 = vmatmul.mubr.f32.gmra.mxu0 %v360
    %v607 = vpop.f32.mrf.mxu0
    %v608 = vadd.f32 %v494, %v607
    %v609 = vpop.f32.mrf.mxu0
    %610 = vmatprep.mubr.f32.mxu0 0.0
    %611 = vmatmul.mubr.f32.gmra.mxu0 %v365
    %v612 = vpop.f32.mrf.mxu0
    %v613 = vadd.f32 %v494, %v612
    %v614 = vpop.f32.mrf.mxu0
    %615 = vmatprep.mubr.f32.mxu0 0.0
    %616 = vmatmul.mubr.f32.gmra.mxu0 %v370
    %v617 = vpop.f32.mrf.mxu0
    %v618 = vadd.f32 %v494, %v617
    %v619 = vpop.f32.mrf.mxu0
    %620 = vmatprep.mubr.f32.mxu0 0.0
    %621 = vmatmul.mubr.f32.gmra.mxu0 %v375
    %v622 = vpop.f32.mrf.mxu0
    %v623 = vadd.f32 %v494, %v622
    %v624 = vpop.f32.mrf.mxu0
    %625 = vmatprep.mubr.f32.mxu0 0.0
    %626 = vmatmul.mubr.f32.gmra.mxu0 %v380
    %v627 = vpop.f32.mrf.mxu0
    %v628 = vadd.f32 %v494, %v627
    %v629 = vpop.f32.mrf.mxu0
    %630 = vmatprep.mubr.f32.mxu0 0.0
    %631 = vmatmul.mubr.f32.gmra.mxu0 %v385
    %v632 = vpop.f32.mrf.mxu0
    %v633 = vadd.f32 %v494, %v632
    %v634 = vpop.f32.mrf.mxu0
    %635 = vmatprep.mubr.f32.mxu0 0.0
    %636 = vmatmul.mubr.f32.gmra.mxu0 %v390
    %v637 = vpop.f32.mrf.mxu0
    %v638 = vadd.f32 %v494, %v637
    %v639 = vpop.f32.mrf.mxu0
    %640 = vmatprep.mubr.f32.mxu0 0.0
    %641 = vmatmul.mubr.f32.gmra.mxu0 %v395
    %v642 = vpop.f32.mrf.mxu0
    %v643 = vadd.f32 %v494, %v642
    %v644 = vpop.f32.mrf.mxu0
    %645 = vmatprep.mubr.f32.mxu0 0.0
    %646 = vmatmul.mubr.f32.gmra.mxu0 %v400
    %v647 = vpop.f32.mrf.mxu0
    %v648 = vadd.f32 %v494, %v647
    %v649 = vpop.f32.mrf.mxu0
    %650 = vmatprep.mubr.f32.mxu0 0.0
    %651 = vmatmul.mubr.f32.gmra.mxu0 %v405
    %v652 = vpop.f32.mrf.mxu0
    %v653 = vadd.f32 %v494, %v652
    %v654 = vpop.f32.mrf.mxu0
    %655 = vmatprep.mubr.f32.mxu0 0.0
    %656 = vmatmul.mubr.f32.gmra.mxu0 %v410
    %v657 = vpop.f32.mrf.mxu0
    %v658 = vadd.f32 %v494, %v657
    %v659 = vpop.f32.mrf.mxu0
    %660 = vmatprep.mubr.f32.mxu0 0.0
    %661 = vmatmul.mubr.f32.gmra.mxu0 %v415
    %v662 = vpop.f32.mrf.mxu0
    %v663 = vadd.f32 %v494, %v662
    %v664 = vpop.f32.mrf.mxu0
    %665 = vmatprep.mubr.f32.mxu0 0.0
    %666 = vmatmul.mubr.f32.gmra.mxu0 %v420
    %v667 = vpop.f32.mrf.mxu0
    %v668 = vadd.f32 %v494, %v667
    %v669 = vpop.f32.mrf.mxu0
    %670 = vmatprep.mubr.f32.mxu0 0.0
    %671 = vmatmul.mubr.f32.gmra.mxu0 %v425
    %v672 = vpop.f32.mrf.mxu0
    %v673 = vadd.f32 %v494, %v672
    %v674 = vpop.f32.mrf.mxu0
    %675 = vmatprep.mubr.f32.mxu0 0.0
    %676 = vmatmul.mubr.f32.gmra.mxu0 %v430
    %v677 = vpop.f32.mrf.mxu0
    %v678 = vadd.f32 %v494, %v677
    %v679 = vpop.f32.mrf.mxu0
    %680 = vmatprep.mubr.f32.mxu0 0.0
    %681 = vmatmul.mubr.f32.gmra.mxu0 %v435
    %v682 = vpop.f32.mrf.mxu0
    %v683 = vadd.f32 %v494, %v682
    %v684 = vpop.f32.mrf.mxu0
    %685 = vmatprep.mubr.f32.mxu0 0.0
    %686 = vmatmul.mubr.f32.gmra.mxu0 %v440
    %v687 = vpop.f32.mrf.mxu0
    %v688 = vadd.f32 %v494, %v687
    %v689 = vpop.f32.mrf.mxu0
    %690 = vmatprep.mubr.f32.mxu0 0.0
    %691 = vmatmul.mubr.f32.gmra.mxu0 %v445
    %v692 = vpop.f32.mrf.mxu0
    %v693 = vadd.f32 %v494, %v692
    %v694 = vpop.f32.mrf.mxu0
    %695 = vmatprep.mubr.f32.mxu0 0.0
    %696 = vmatmul.mubr.f32.gmra.mxu0 %v450
    %v697 = vpop.f32.mrf.mxu0
    %v698 = vadd.f32 %v494, %v697
    %v699 = vpop.f32.mrf.mxu0
    %700 = vmatprep.mubr.f32.mxu0 0.0
    %701 = vmatmul.mubr.f32.gmra.mxu0 %v455
    %v702 = vpop.f32.mrf.mxu0
    %v703 = vadd.f32 %v494, %v702
    %v704 = vpop.f32.mrf.mxu0
    %705 = vmatprep.mubr.f32.mxu0 0.0
    %706 = vmatmul.mubr.f32.gmra.mxu0 %v460
    %v707 = vpop.f32.mrf.mxu0
    %v708 = vadd.f32 %v494, %v707
    %v709 = vpop.f32.mrf.mxu0
    %710 = vmatprep.mubr.f32.mxu0 0.0
    %711 = vmatmul.mubr.f32.gmra.mxu0 %v465
    %v712 = vpop.f32.mrf.mxu0
    %v713 = vadd.f32 %v494, %v712
    %v714 = vpop.f32.mrf.mxu0
    %715 = vmatprep.mubr.f32.mxu0 0.0
    %716 = vmatmul.mubr.f32.gmra.mxu0 %v470
    %v717 = vpop.f32.mrf.mxu0
    %v718 = vadd.f32 %v494, %v717
    %v719 = vpop.f32.mrf.mxu0
    %720 = vdwg.mxu0
    %v721 = vmax.f32 %v563, 0.0
    %v722 = vmax.f32 %v568, 0.0
    %v723 = vmax.f32 %v573, 0.0
    %v724 = vmax.f32 %v578, 0.0
    %v725 = vmax.f32 %v583, 0.0
    %v726 = vmax.f32 %v588, 0.0
    %v727 = vmax.f32 %v593, 0.0
    %v728 = vmax.f32 %v598, 0.0
    %v729 = vmax.f32 %v603, 0.0
    %v730 = vmax.f32 %v608, 0.0
    %v731 = vmax.f32 %v613, 0.0
    %v732 = vmax.f32 %v618, 0.0
    %v733 = vmax.f32 %v623, 0.0
    %v734 = vmax.f32 %v628, 0.0
    %v735 = vmax.f32 %v633, 0.0
    %v736 = vmax.f32 %v638, 0.0
    %v737 = vmax.f32 %v643, 0.0
    %v738 = vmax.f32 %v648, 0.0
    %v739 = vmax.f32 %v653, 0.0
    %v740 = vmax.f32 %v658, 0.0
    %v741 = vmax.f32 %v663, 0.0
    %v742 = vmax.f32 %v668, 0.0
    %v743 = vmax.f32 %v673, 0.0
    %v744 = vmax.f32 %v678, 0.0
    %v745 = vmax.f32 %v683, 0.0
    %v746 = vmax.f32 %v688, 0.0
    %v747 = vmax.f32 %v693, 0.0
    %v748 = vmax.f32 %v698, 0.0
    %v749 = vmax.f32 %v703, 0.0
    %v750 = vmax.f32 %v708, 0.0
    %v751 = vmax.f32 %v713, 0.0
    %v752 = vmax.f32 %v718, 0.0
    %753 = vmatprep.subr.mxu0 0.0
    %754 = vmatpush1.msra.mxu0 %v736
    %755 = vmatprep.subr.mxu0 0.0
    %756 = vmatpush1.msra.mxu0 %v735
    %757 = vmatprep.subr.mxu0 0.0
    %758 = vmatpush1.msra.mxu0 %v734
    %759 = vmatprep.subr.mxu0 0.0
    %760 = vmatpush1.msra.mxu0 %v733
    %761 = vmatprep.subr.mxu0 0.0
    %762 = vmatpush1.msra.mxu0 %v732
    %763 = vmatprep.subr.mxu0 0.0
    %764 = vmatpush1.msra.mxu0 %v731
    %765 = vmatprep.subr.mxu0 0.0
    %766 = vmatpush1.msra.mxu0 %v730
    %767 = vmatprep.subr.mxu0 0.0
    %768 = vmatpush1.msra.mxu0 %v729
    %769 = vmatprep.subr.mxu0 0.0
    %770 = vmatpush1.msra.mxu0 %v728
    %771 = vmatprep.subr.mxu0 0.0
    %772 = vmatpush1.msra.mxu0 %v727
    %773 = vmatprep.subr.mxu0 0.0
    %774 = vmatpush1.msra.mxu0 %v726
    %775 = vmatprep.subr.mxu0 0.0
    %776 = vmatpush1.msra.mxu0 %v725
    %777 = vmatprep.subr.mxu0 0.0
    %778 = vmatpush1.msra.mxu0 %v724
    %779 = vmatprep.subr.mxu0 0.0
    %780 = vmatpush1.msra.mxu0 %v723
    %781 = vmatprep.subr.mxu0 0.0
    %782 = vmatpush1.msra.mxu0 %v722
    %783 = vmatprep.subr.mxu0 0.0
    %784 = vmatpush1.msra.mxu0 %v721
    %785 = vmatprep.subr.mxu0 0.0
    %786 = vmatpush2.msra.mxu0 %v752
    %787 = vmatprep.subr.mxu0 0.0
    %788 = vmatpush2.msra.mxu0 %v751
    %789 = vmatprep.subr.mxu0 0.0
    %790 = vmatpush2.msra.mxu0 %v750
    %791 = vmatprep.subr.mxu0 0.0
    %792 = vmatpush2.msra.mxu0 %v749
    %793 = vmatprep.subr.mxu0 0.0
    %794 = vmatpush2.msra.mxu0 %v748
    %795 = vmatprep.subr.mxu0 0.0
    %796 = vmatpush2.msra.mxu0 %v747
    %797 = vmatprep.subr.mxu0 0.0
    %798 = vmatpush2.msra.mxu0 %v746
    %799 = vmatprep.subr.mxu0 0.0
    %800 = vmatpush2.msra.mxu0 %v745
    %801 = vmatprep.subr.mxu0 0.0
    %802 = vmatpush2.msra.mxu0 %v744
    %803 = vmatprep.subr.mxu0 0.0
    %804 = vmatpush2.msra.mxu0 %v743
    %805 = vmatprep.subr.mxu0 0.0
    %806 = vmatpush2.msra.mxu0 %v742
    %807 = vmatprep.subr.mxu0 0.0
    %808 = vmatpush2.msra.mxu0 %v741
    %809 = vmatprep.subr.mxu0 0.0
    %810 = vmatpush2.msra.mxu0 %v740
    %811 = vmatprep.subr.mxu0 0.0
    %812 = vmatpush2.msra.mxu0 %v739
    %813 = vmatprep.subr.mxu0 0.0
    %814 = vmatpush2.msra.mxu0 %v738
    %815 = vmatprep.subr.mxu0 0.0
    %816 = vmatpush2.msra.mxu0 %v737
    %817 = vmatprep.mubr.f32.mxu0 %v153
    %818 = vmatmul.mubr.f32.gmra.mxu0 %v152
    %v819 = vpop.f32.mrf.mxu0
    %v820 = vadd.f32 0.0, %v819
    %v821 = vpop.f32.mrf.mxu0
    %822 = vmatprep.mubr.f32.mxu0 %v155
    %823 = vmatmul.mubr.f32.gmra.mxu0 %v154
    %v824 = vpop.f32.mrf.mxu0
    %v825 = vadd.f32 0.0, %v824
    %v826 = vpop.f32.mrf.mxu0
    %827 = vmatprep.mubr.f32.mxu0 %v157
    %828 = vmatmul.mubr.f32.gmra.mxu0 %v156
    %v829 = vpop.f32.mrf.mxu0
    %v830 = vadd.f32 0.0, %v829
    %v831 = vpop.f32.mrf.mxu0
    %832 = vmatprep.mubr.f32.mxu0 %v159
    %833 = vmatmul.mubr.f32.gmra.mxu0 %v158
    %v834 = vpop.f32.mrf.mxu0
    %v835 = vadd.f32 0.0, %v834
    %v836 = vpop.f32.mrf.mxu0
    %837 = vmatprep.mubr.f32.mxu0 %v161
    %838 = vmatmul.mubr.f32.gmra.mxu0 %v160
    %v839 = vpop.f32.mrf.mxu0
    %v840 = vadd.f32 0.0, %v839
    %v841 = vpop.f32.mrf.mxu0
    %842 = vmatprep.mubr.f32.mxu0 %v163
    %843 = vmatmul.mubr.f32.gmra.mxu0 %v162
    %v844 = vpop.f32.mrf.mxu0
    %v845 = vadd.f32 0.0, %v844
    %v846 = vpop.f32.mrf.mxu0
    %847 = vmatprep.mubr.f32.mxu0 %v165
    %848 = vmatmul.mubr.f32.gmra.mxu0 %v164
    %v849 = vpop.f32.mrf.mxu0
    %v850 = vadd.f32 0.0, %v849
    %v851 = vpop.f32.mrf.mxu0
    %852 = vmatprep.mubr.f32.mxu0 %v167
    %853 = vmatmul.mubr.f32.gmra.mxu0 %v166
    %v854 = vpop.f32.mrf.mxu0
    %v855 = vadd.f32 0.0, %v854
    %v856 = vpop.f32.mrf.mxu0
    %857 = vmatprep.mubr.f32.mxu0 %v169
    %858 = vmatmul.mubr.f32.gmra.mxu0 %v168
    %v859 = vpop.f32.mrf.mxu0
    %v860 = vadd.f32 0.0, %v859
    %v861 = vpop.f32.mrf.mxu0
    %862 = vmatprep.mubr.f32.mxu0 %v171
    %863 = vmatmul.mubr.f32.gmra.mxu0 %v170
    %v864 = vpop.f32.mrf.mxu0
    %v865 = vadd.f32 0.0, %v864
    %v866 = vpop.f32.mrf.mxu0
    %867 = vmatprep.mubr.f32.mxu0 %v173
    %868 = vmatmul.mubr.f32.gmra.mxu0 %v172
    %v869 = vpop.f32.mrf.mxu0
    %v870 = vadd.f32 0.0, %v869
    %v871 = vpop.f32.mrf.mxu0
    %872 = vmatprep.mubr.f32.mxu0 %v175
    %873 = vmatmul.mubr.f32.gmra.mxu0 %v174
    %v874 = vpop.f32.mrf.mxu0
    %v875 = vadd.f32 0.0, %v874
    %v876 = vpop.f32.mrf.mxu0
    %877 = vmatprep.mubr.f32.mxu0 %v177
    %878 = vmatmul.mubr.f32.gmra.mxu0 %v176
    %v879 = vpop.f32.mrf.mxu0
    %v880 = vadd.f32 0.0, %v879
    %v881 = vpop.f32.mrf.mxu0
    %882 = vmatprep.mubr.f32.mxu0 %v179
    %883 = vmatmul.mubr.f32.gmra.mxu0 %v178
    %v884 = vpop.f32.mrf.mxu0
    %v885 = vadd.f32 0.0, %v884
    %v886 = vpop.f32.mrf.mxu0
    %887 = vmatprep.mubr.f32.mxu0 %v181
    %888 = vmatmul.mubr.f32.gmra.mxu0 %v180
    %v889 = vpop.f32.mrf.mxu0
    %v890 = vadd.f32 0.0, %v889
    %v891 = vpop.f32.mrf.mxu0
    %892 = vmatprep.mubr.f32.mxu0 %v183
    %893 = vmatmul.mubr.f32.gmra.mxu0 %v182
    %v894 = vpop.f32.mrf.mxu0
    %v895 = vadd.f32 0.0, %v894
    %v896 = vpop.f32.mrf.mxu0
    %897 = vmatprep.mubr.f32.mxu0 %v185
    %898 = vmatmul.mubr.f32.gmra.mxu0 %v184
    %v899 = vpop.f32.mrf.mxu0
    %v900 = vadd.f32 0.0, %v899
    %v901 = vpop.f32.mrf.mxu0
    %902 = vmatprep.mubr.f32.mxu0 %v187
    %903 = vmatmul.mubr.f32.gmra.mxu0 %v186
    %v904 = vpop.f32.mrf.mxu0
    %v905 = vadd.f32 0.0, %v904
    %v906 = vpop.f32.mrf.mxu0
    %907 = vmatprep.mubr.f32.mxu0 %v189
    %908 = vmatmul.mubr.f32.gmra.mxu0 %v188
    %v909 = vpop.f32.mrf.mxu0
    %v910 = vadd.f32 0.0, %v909
    %v911 = vpop.f32.mrf.mxu0
    %912 = vmatprep.mubr.f32.mxu0 %v191
    %913 = vmatmul.mubr.f32.gmra.mxu0 %v190
    %v914 = vpop.f32.mrf.mxu0
    %v915 = vadd.f32 0.0, %v914
    %v916 = vpop.f32.mrf.mxu0
    %917 = vmatprep.mubr.f32.mxu0 %v193
    %918 = vmatmul.mubr.f32.gmra.mxu0 %v192
    %v919 = vpop.f32.mrf.mxu0
    %v920 = vadd.f32 0.0, %v919
    %v921 = vpop.f32.mrf.mxu0
    %922 = vmatprep.mubr.f32.mxu0 %v195
    %923 = vmatmul.mubr.f32.gmra.mxu0 %v194
    %v924 = vpop.f32.mrf.mxu0
    %v925 = vadd.f32 0.0, %v924
    %v926 = vpop.f32.mrf.mxu0
    %927 = vmatprep.mubr.f32.mxu0 %v197
    %928 = vmatmul.mubr.f32.gmra.mxu0 %v196
    %v929 = vpop.f32.mrf.mxu0
    %v930 = vadd.f32 0.0, %v929
    %v931 = vpop.f32.mrf.mxu0
    %932 = vmatprep.mubr.f32.mxu0 %v199
    %933 = vmatmul.mubr.f32.gmra.mxu0 %v198
    %v934 = vpop.f32.mrf.mxu0
    %v935 = vadd.f32 0.0, %v934
    %v936 = vpop.f32.mrf.mxu0
    %937 = vmatprep.mubr.f32.mxu0 %v201
    %938 = vmatmul.mubr.f32.gmra.mxu0 %v200
    %v939 = vpop.f32.mrf.mxu0
    %v940 = vadd.f32 0.0, %v939
    %v941 = vpop.f32.mrf.mxu0
    %942 = vmatprep.mubr.f32.mxu0 %v203
    %943 = vmatmul.mubr.f32.gmra.mxu0 %v202
    %v944 = vpop.f32.mrf.mxu0
    %v945 = vadd.f32 0.0, %v944
    %v946 = vpop.f32.mrf.mxu0
    %947 = vmatprep.mubr.f32.mxu0 %v205
    %948 = vmatmul.mubr.f32.gmra.mxu0 %v204
    %v949 = vpop.f32.mrf.mxu0
    %v950 = vadd.f32 0.0, %v949
    %v951 = vpop.f32.mrf.mxu0
    %952 = vmatprep.mubr.f32.mxu0 %v207
    %953 = vmatmul.mubr.f32.gmra.mxu0 %v206
    %v954 = vpop.f32.mrf.mxu0
    %v955 = vadd.f32 0.0, %v954
    %v956 = vpop.f32.mrf.mxu0
    %957 = vmatprep.mubr.f32.mxu0 %v209
    %958 = vmatmul.mubr.f32.gmra.mxu0 %v208
    %v959 = vpop.f32.mrf.mxu0
    %v960 = vadd.f32 0.0, %v959
    %v961 = vpop.f32.mrf.mxu0
    %962 = vmatprep.mubr.f32.mxu0 %v211
    %963 = vmatmul.mubr.f32.gmra.mxu0 %v210
    %v964 = vpop.f32.mrf.mxu0
    %v965 = vadd.f32 0.0, %v964
    %v966 = vpop.f32.mrf.mxu0
    %967 = vmatprep.mubr.f32.mxu0 %v213
    %968 = vmatmul.mubr.f32.gmra.mxu0 %v212
    %v969 = vpop.f32.mrf.mxu0
    %v970 = vadd.f32 0.0, %v969
    %v971 = vpop.f32.mrf.mxu0
    %972 = vmatprep.mubr.f32.mxu0 %v215
    %973 = vmatmul.mubr.f32.gmra.mxu0 %v214
    %v974 = vpop.f32.mrf.mxu0
    %v975 = vadd.f32 0.0, %v974
    %v976 = vpop.f32.mrf.mxu0
    %977 = vdwg.mxu0
    %v978 = vld [vmem:[#allocation8] sm:$0xff]
    %v979 = vld [vmem:[#allocation8 + $0x8] sm:$0xff]
    %v980 = vld [vmem:[#allocation8 + $0x10] sm:$0xff]
    %v981 = vld [vmem:[#allocation8 + $0x18] sm:$0xff]
    %v982 = vld [vmem:[#allocation8 + $0x20] sm:$0xff]
    %v983 = vld [vmem:[#allocation8 + $0x28] sm:$0xff]
    %v984 = vld [vmem:[#allocation8 + $0x30] sm:$0xff]
    %v985 = vld [vmem:[#allocation8 + $0x38] sm:$0xff]
    %v986 = vld [vmem:[#allocation8 + $0x40] sm:$0xff]
    %v987 = vld [vmem:[#allocation8 + $0x48] sm:$0xff]
    %v988 = vld [vmem:[#allocation8 + $0x50] sm:$0xff]
    %v989 = vld [vmem:[#allocation8 + $0x58] sm:$0xff]
    %v990 = vld [vmem:[#allocation8 + $0x60] sm:$0xff]
    %v991 = vld [vmem:[#allocation8 + $0x68] sm:$0xff]
    %v992 = vld [vmem:[#allocation8 + $0x70] sm:$0xff]
    %v993 = vld [vmem:[#allocation8 + $0x78] sm:$0xff]
    %v994 = vld [vmem:[%s5] sm:$0x1]
    %v996 = vlaneseq
    %v997 = vshrl.u32 %v996, 7
    %v998 = vsub.s32 0, %v997
    %v999 = vrot.slane %v994, %v998
    %1001 = vmatprep.subr.mxu0 0.0
    %1002 = vmatpush1.msra.mxu0 %v993
    %1003 = vmatprep.subr.mxu0 0.0
    %1004 = vmatpush1.msra.mxu0 %v992
    %1005 = vmatprep.subr.mxu0 0.0
    %1006 = vmatpush1.msra.mxu0 %v991
    %1007 = vmatprep.subr.mxu0 0.0
    %1008 = vmatpush1.msra.mxu0 %v990
    %1009 = vmatprep.subr.mxu0 0.0
    %1010 = vmatpush1.msra.mxu0 %v989
    %1011 = vmatprep.subr.mxu0 0.0
    %1012 = vmatpush1.msra.mxu0 %v988
    %1013 = vmatprep.subr.mxu0 0.0
    %1014 = vmatpush1.msra.mxu0 %v987
    %1015 = vmatprep.subr.mxu0 0.0
    %1016 = vmatpush1.msra.mxu0 %v986
    %1017 = vmatprep.subr.mxu0 0.0
    %1018 = vmatpush1.msra.mxu0 %v985
    %1019 = vmatprep.subr.mxu0 0.0
    %1020 = vmatpush1.msra.mxu0 %v984
    %1021 = vmatprep.subr.mxu0 0.0
    %1022 = vmatpush1.msra.mxu0 %v983
    %1023 = vmatprep.subr.mxu0 0.0
    %1024 = vmatpush1.msra.mxu0 %v982
    %1025 = vmatprep.subr.mxu0 0.0
    %1026 = vmatpush1.msra.mxu0 %v981
    %1027 = vmatprep.subr.mxu0 0.0
    %1028 = vmatpush1.msra.mxu0 %v980
    %1029 = vmatprep.subr.mxu0 0.0
    %1030 = vmatpush1.msra.mxu0 %v979
    %1031 = vmatprep.subr.mxu0 0.0
    %1032 = vmatpush1.msra.mxu0 %v978
    %1033 = vmatprep.subr.mxu0 0.0
    %1034 = vmatpush2.msra.mxu0 0.0
    %1035 = vmatprep.subr.mxu0 0.0
    %1036 = vmatpush2.msra.mxu0 0.0
    %1037 = vmatprep.subr.mxu0 0.0
    %1038 = vmatpush2.msra.mxu0 0.0
    %1039 = vmatprep.subr.mxu0 0.0
    %1040 = vmatpush2.msra.mxu0 0.0
    %1041 = vmatprep.subr.mxu0 0.0
    %1042 = vmatpush2.msra.mxu0 0.0
    %1043 = vmatprep.subr.mxu0 0.0
    %1044 = vmatpush2.msra.mxu0 0.0
    %1045 = vmatprep.subr.mxu0 0.0
    %1046 = vmatpush2.msra.mxu0 0.0
    %1047 = vmatprep.subr.mxu0 0.0
    %1048 = vmatpush2.msra.mxu0 0.0
    %1049 = vmatprep.subr.mxu0 0.0
    %1050 = vmatpush2.msra.mxu0 0.0
    %1051 = vmatprep.subr.mxu0 0.0
    %1052 = vmatpush2.msra.mxu0 0.0
    %1053 = vmatprep.subr.mxu0 0.0
    %1054 = vmatpush2.msra.mxu0 0.0
    %1055 = vmatprep.subr.mxu0 0.0
    %1056 = vmatpush2.msra.mxu0 0.0
    %1057 = vmatprep.subr.mxu0 0.0
    %1058 = vmatpush2.msra.mxu0 0.0
    %1059 = vmatprep.subr.mxu0 0.0
    %1060 = vmatpush2.msra.mxu0 0.0
    %1061 = vmatprep.subr.mxu0 0.0
    %1062 = vmatpush2.msra.mxu0 0.0
    %1063 = vmatprep.subr.mxu0 0.0
    %1064 = vmatpush2.msra.mxu0 0.0
    %1065 = vmatprep.mubr.f32.mxu0 0.0
    %1066 = vmatmul.mubr.f32.gmra.mxu0 %v820
    %v1067 = vpop.f32.mrf.mxu0
    %v1068 = vadd.f32 %v999, %v1067
    %v1069 = vpop.f32.mrf.mxu0
    %1070 = vmatprep.mubr.f32.mxu0 0.0
    %1071 = vmatmul.mubr.f32.gmra.mxu0 %v825
    %v1072 = vpop.f32.mrf.mxu0
    %v1073 = vadd.f32 %v999, %v1072
    %v1074 = vpop.f32.mrf.mxu0
    %1075 = vmatprep.mubr.f32.mxu0 0.0
    %1076 = vmatmul.mubr.f32.gmra.mxu0 %v830
    %v1077 = vpop.f32.mrf.mxu0
    %v1078 = vadd.f32 %v999, %v1077
    %v1079 = vpop.f32.mrf.mxu0
    %1080 = vmatprep.mubr.f32.mxu0 0.0
    %1081 = vmatmul.mubr.f32.gmra.mxu0 %v835
    %v1082 = vpop.f32.mrf.mxu0
    %v1083 = vadd.f32 %v999, %v1082
    %v1084 = vpop.f32.mrf.mxu0
    %1085 = vmatprep.mubr.f32.mxu0 0.0
    %1086 = vmatmul.mubr.f32.gmra.mxu0 %v840
    %v1087 = vpop.f32.mrf.mxu0
    %v1088 = vadd.f32 %v999, %v1087
    %v1089 = vpop.f32.mrf.mxu0
    %1090 = vmatprep.mubr.f32.mxu0 0.0
    %1091 = vmatmul.mubr.f32.gmra.mxu0 %v845
    %v1092 = vpop.f32.mrf.mxu0
    %v1093 = vadd.f32 %v999, %v1092
    %v1094 = vpop.f32.mrf.mxu0
    %1095 = vmatprep.mubr.f32.mxu0 0.0
    %1096 = vmatmul.mubr.f32.gmra.mxu0 %v850
    %v1097 = vpop.f32.mrf.mxu0
    %v1098 = vadd.f32 %v999, %v1097
    %v1099 = vpop.f32.mrf.mxu0
    %1100 = vmatprep.mubr.f32.mxu0 0.0
    %1101 = vmatmul.mubr.f32.gmra.mxu0 %v855
    %v1102 = vpop.f32.mrf.mxu0
    %v1103 = vadd.f32 %v999, %v1102
    %v1104 = vpop.f32.mrf.mxu0
    %1105 = vmatprep.mubr.f32.mxu0 0.0
    %1106 = vmatmul.mubr.f32.gmra.mxu0 %v860
    %v1107 = vpop.f32.mrf.mxu0
    %v1108 = vadd.f32 %v999, %v1107
    %v1109 = vpop.f32.mrf.mxu0
    %1110 = vmatprep.mubr.f32.mxu0 0.0
    %1111 = vmatmul.mubr.f32.gmra.mxu0 %v865
    %v1112 = vpop.f32.mrf.mxu0
    %v1113 = vadd.f32 %v999, %v1112
    %v1114 = vpop.f32.mrf.mxu0
    %1115 = vmatprep.mubr.f32.mxu0 0.0
    %1116 = vmatmul.mubr.f32.gmra.mxu0 %v870
    %v1117 = vpop.f32.mrf.mxu0
    %v1118 = vadd.f32 %v999, %v1117
    %v1119 = vpop.f32.mrf.mxu0
    %1120 = vmatprep.mubr.f32.mxu0 0.0
    %1121 = vmatmul.mubr.f32.gmra.mxu0 %v875
    %v1122 = vpop.f32.mrf.mxu0
    %v1123 = vadd.f32 %v999, %v1122
    %v1124 = vpop.f32.mrf.mxu0
    %1125 = vmatprep.mubr.f32.mxu0 0.0
    %1126 = vmatmul.mubr.f32.gmra.mxu0 %v880
    %v1127 = vpop.f32.mrf.mxu0
    %v1128 = vadd.f32 %v999, %v1127
    %v1129 = vpop.f32.mrf.mxu0
    %1130 = vmatprep.mubr.f32.mxu0 0.0
    %1131 = vmatmul.mubr.f32.gmra.mxu0 %v885
    %v1132 = vpop.f32.mrf.mxu0
    %v1133 = vadd.f32 %v999, %v1132
    %v1134 = vpop.f32.mrf.mxu0
    %1135 = vmatprep.mubr.f32.mxu0 0.0
    %1136 = vmatmul.mubr.f32.gmra.mxu0 %v890
    %v1137 = vpop.f32.mrf.mxu0
    %v1138 = vadd.f32 %v999, %v1137
    %v1139 = vpop.f32.mrf.mxu0
    %1140 = vmatprep.mubr.f32.mxu0 0.0
    %1141 = vmatmul.mubr.f32.gmra.mxu0 %v895
    %v1142 = vpop.f32.mrf.mxu0
    %v1143 = vadd.f32 %v999, %v1142
    %v1144 = vpop.f32.mrf.mxu0
    %1145 = vmatprep.mubr.f32.mxu0 0.0
    %1146 = vmatmul.mubr.f32.gmra.mxu0 %v900
    %v1147 = vpop.f32.mrf.mxu0
    %v1148 = vadd.f32 %v999, %v1147
    %v1149 = vpop.f32.mrf.mxu0
    %1150 = vmatprep.mubr.f32.mxu0 0.0
    %1151 = vmatmul.mubr.f32.gmra.mxu0 %v905
    %v1152 = vpop.f32.mrf.mxu0
    %v1153 = vadd.f32 %v999, %v1152
    %v1154 = vpop.f32.mrf.mxu0
    %1155 = vmatprep.mubr.f32.mxu0 0.0
    %1156 = vmatmul.mubr.f32.gmra.mxu0 %v910
    %v1157 = vpop.f32.mrf.mxu0
    %v1158 = vadd.f32 %v999, %v1157
    %v1159 = vpop.f32.mrf.mxu0
    %1160 = vmatprep.mubr.f32.mxu0 0.0
    %1161 = vmatmul.mubr.f32.gmra.mxu0 %v915
    %v1162 = vpop.f32.mrf.mxu0
    %v1163 = vadd.f32 %v999, %v1162
    %v1164 = vpop.f32.mrf.mxu0
    %1165 = vmatprep.mubr.f32.mxu0 0.0
    %1166 = vmatmul.mubr.f32.gmra.mxu0 %v920
    %v1167 = vpop.f32.mrf.mxu0
    %v1168 = vadd.f32 %v999, %v1167
    %v1169 = vpop.f32.mrf.mxu0
    %1170 = vmatprep.mubr.f32.mxu0 0.0
    %1171 = vmatmul.mubr.f32.gmra.mxu0 %v925
    %v1172 = vpop.f32.mrf.mxu0
    %v1173 = vadd.f32 %v999, %v1172
    %v1174 = vpop.f32.mrf.mxu0
    %1175 = vmatprep.mubr.f32.mxu0 0.0
    %1176 = vmatmul.mubr.f32.gmra.mxu0 %v930
    %v1177 = vpop.f32.mrf.mxu0
    %v1178 = vadd.f32 %v999, %v1177
    %v1179 = vpop.f32.mrf.mxu0
    %1180 = vmatprep.mubr.f32.mxu0 0.0
    %1181 = vmatmul.mubr.f32.gmra.mxu0 %v935
    %v1182 = vpop.f32.mrf.mxu0
    %v1183 = vadd.f32 %v999, %v1182
    %v1184 = vpop.f32.mrf.mxu0
    %1185 = vmatprep.mubr.f32.mxu0 0.0
    %1186 = vmatmul.mubr.f32.gmra.mxu0 %v940
    %v1187 = vpop.f32.mrf.mxu0
    %v1188 = vadd.f32 %v999, %v1187
    %v1189 = vpop.f32.mrf.mxu0
    %1190 = vmatprep.mubr.f32.mxu0 0.0
    %1191 = vmatmul.mubr.f32.gmra.mxu0 %v945
    %v1192 = vpop.f32.mrf.mxu0
    %v1193 = vadd.f32 %v999, %v1192
    %v1194 = vpop.f32.mrf.mxu0
    %1195 = vmatprep.mubr.f32.mxu0 0.0
    %1196 = vmatmul.mubr.f32.gmra.mxu0 %v950
    %v1197 = vpop.f32.mrf.mxu0
    %v1198 = vadd.f32 %v999, %v1197
    %v1199 = vpop.f32.mrf.mxu0
    %1200 = vmatprep.mubr.f32.mxu0 0.0
    %1201 = vmatmul.mubr.f32.gmra.mxu0 %v955
    %v1202 = vpop.f32.mrf.mxu0
    %v1203 = vadd.f32 %v999, %v1202
    %v1204 = vpop.f32.mrf.mxu0
    %1205 = vmatprep.mubr.f32.mxu0 0.0
    %1206 = vmatmul.mubr.f32.gmra.mxu0 %v960
    %v1207 = vpop.f32.mrf.mxu0
    %v1208 = vadd.f32 %v999, %v1207
    %v1209 = vpop.f32.mrf.mxu0
    %1210 = vmatprep.mubr.f32.mxu0 0.0
    %1211 = vmatmul.mubr.f32.gmra.mxu0 %v965
    %v1212 = vpop.f32.mrf.mxu0
    %v1213 = vadd.f32 %v999, %v1212
    %v1214 = vpop.f32.mrf.mxu0
    %1215 = vmatprep.mubr.f32.mxu0 0.0
    %1216 = vmatmul.mubr.f32.gmra.mxu0 %v970
    %v1217 = vpop.f32.mrf.mxu0
    %v1218 = vadd.f32 %v999, %v1217
    %v1219 = vpop.f32.mrf.mxu0
    %1220 = vmatprep.mubr.f32.mxu0 0.0
    %1221 = vmatmul.mubr.f32.gmra.mxu0 %v975
    %v1222 = vpop.f32.mrf.mxu0
    %v1223 = vadd.f32 %v999, %v1222
    %v1224 = vpop.f32.mrf.mxu0
    %1225 = vdwg.mxu0
    %v1226 = vmax.f32 %v1068, 0.0
    %v1227 = vmax.f32 %v1073, 0.0
    %v1228 = vmax.f32 %v1078, 0.0
    %v1229 = vmax.f32 %v1083, 0.0
    %v1230 = vmax.f32 %v1088, 0.0
    %v1231 = vmax.f32 %v1093, 0.0
    %v1232 = vmax.f32 %v1098, 0.0
    %v1233 = vmax.f32 %v1103, 0.0
    %v1234 = vmax.f32 %v1108, 0.0
    %v1235 = vmax.f32 %v1113, 0.0
    %v1236 = vmax.f32 %v1118, 0.0
    %v1237 = vmax.f32 %v1123, 0.0
    %v1238 = vmax.f32 %v1128, 0.0
    %v1239 = vmax.f32 %v1133, 0.0
    %v1240 = vmax.f32 %v1138, 0.0
    %v1241 = vmax.f32 %v1143, 0.0
    %v1242 = vmax.f32 %v1148, 0.0
    %v1243 = vmax.f32 %v1153, 0.0
    %v1244 = vmax.f32 %v1158, 0.0
    %v1245 = vmax.f32 %v1163, 0.0
    %v1246 = vmax.f32 %v1168, 0.0
    %v1247 = vmax.f32 %v1173, 0.0
    %v1248 = vmax.f32 %v1178, 0.0
    %v1249 = vmax.f32 %v1183, 0.0
    %v1250 = vmax.f32 %v1188, 0.0
    %v1251 = vmax.f32 %v1193, 0.0
    %v1252 = vmax.f32 %v1198, 0.0
    %v1253 = vmax.f32 %v1203, 0.0
    %v1254 = vmax.f32 %v1208, 0.0
    %v1255 = vmax.f32 %v1213, 0.0
    %v1256 = vmax.f32 %v1218, 0.0
    %v1257 = vmax.f32 %v1223, 0.0
    %1258 = vmatprep.subr.mxu0 0.0
    %1259 = vmatpush1.msra.mxu0 %v1241
    %1260 = vmatprep.subr.mxu0 0.0
    %1261 = vmatpush1.msra.mxu0 %v1240
    %1262 = vmatprep.subr.mxu0 0.0
    %1263 = vmatpush1.msra.mxu0 %v1239
    %1264 = vmatprep.subr.mxu0 0.0
    %1265 = vmatpush1.msra.mxu0 %v1238
    %1266 = vmatprep.subr.mxu0 0.0
    %1267 = vmatpush1.msra.mxu0 %v1237
    %1268 = vmatprep.subr.mxu0 0.0
    %1269 = vmatpush1.msra.mxu0 %v1236
    %1270 = vmatprep.subr.mxu0 0.0
    %1271 = vmatpush1.msra.mxu0 %v1235
    %1272 = vmatprep.subr.mxu0 0.0
    %1273 = vmatpush1.msra.mxu0 %v1234
    %1274 = vmatprep.subr.mxu0 0.0
    %1275 = vmatpush1.msra.mxu0 %v1233
    %1276 = vmatprep.subr.mxu0 0.0
    %1277 = vmatpush1.msra.mxu0 %v1232
    %1278 = vmatprep.subr.mxu0 0.0
    %1279 = vmatpush1.msra.mxu0 %v1231
    %1280 = vmatprep.subr.mxu0 0.0
    %1281 = vmatpush1.msra.mxu0 %v1230
    %1282 = vmatprep.subr.mxu0 0.0
    %1283 = vmatpush1.msra.mxu0 %v1229
    %1284 = vmatprep.subr.mxu0 0.0
    %1285 = vmatpush1.msra.mxu0 %v1228
    %1286 = vmatprep.subr.mxu0 0.0
    %1287 = vmatpush1.msra.mxu0 %v1227
    %1288 = vmatprep.subr.mxu0 0.0
    %1289 = vmatpush1.msra.mxu0 %v1226
    %1290 = vmatprep.subr.mxu0 0.0
    %1291 = vmatpush2.msra.mxu0 %v1257
    %1292 = vmatprep.subr.mxu0 0.0
    %1293 = vmatpush2.msra.mxu0 %v1256
    %1294 = vmatprep.subr.mxu0 0.0
    %1295 = vmatpush2.msra.mxu0 %v1255
    %1296 = vmatprep.subr.mxu0 0.0
    %1297 = vmatpush2.msra.mxu0 %v1254
    %1298 = vmatprep.subr.mxu0 0.0
    %1299 = vmatpush2.msra.mxu0 %v1253
    %1300 = vmatprep.subr.mxu0 0.0
    %1301 = vmatpush2.msra.mxu0 %v1252
    %1302 = vmatprep.subr.mxu0 0.0
    %1303 = vmatpush2.msra.mxu0 %v1251
    %1304 = vmatprep.subr.mxu0 0.0
    %1305 = vmatpush2.msra.mxu0 %v1250
    %1306 = vmatprep.subr.mxu0 0.0
    %1307 = vmatpush2.msra.mxu0 %v1249
    %1308 = vmatprep.subr.mxu0 0.0
    %1309 = vmatpush2.msra.mxu0 %v1248
    %1310 = vmatprep.subr.mxu0 0.0
    %1311 = vmatpush2.msra.mxu0 %v1247
    %1312 = vmatprep.subr.mxu0 0.0
    %1313 = vmatpush2.msra.mxu0 %v1246
    %1314 = vmatprep.subr.mxu0 0.0
    %1315 = vmatpush2.msra.mxu0 %v1245
    %1316 = vmatprep.subr.mxu0 0.0
    %1317 = vmatpush2.msra.mxu0 %v1244
    %1318 = vmatprep.subr.mxu0 0.0
    %1319 = vmatpush2.msra.mxu0 %v1243
    %1320 = vmatprep.subr.mxu0 0.0
    %1321 = vmatpush2.msra.mxu0 %v1242
    %1322 = vmatprep.mubr.f32.mxu0 %v153
    %1323 = vmatmul.mubr.f32.gmra.mxu0 %v152
    %v1324 = vpop.f32.mrf.mxu0
    %v1325 = vadd.f32 0.0, %v1324
    %v1326 = vpop.f32.mrf.mxu0
    %1327 = vmatprep.mubr.f32.mxu0 %v155
    %1328 = vmatmul.mubr.f32.gmra.mxu0 %v154
    %v1329 = vpop.f32.mrf.mxu0
    %v1330 = vadd.f32 0.0, %v1329
    %v1331 = vpop.f32.mrf.mxu0
    %1332 = vmatprep.mubr.f32.mxu0 %v157
    %1333 = vmatmul.mubr.f32.gmra.mxu0 %v156
    %v1334 = vpop.f32.mrf.mxu0
    %v1335 = vadd.f32 0.0, %v1334
    %v1336 = vpop.f32.mrf.mxu0
    %1337 = vmatprep.mubr.f32.mxu0 %v159
    %1338 = vmatmul.mubr.f32.gmra.mxu0 %v158
    %v1339 = vpop.f32.mrf.mxu0
    %v1340 = vadd.f32 0.0, %v1339
    %v1341 = vpop.f32.mrf.mxu0
    %1342 = vmatprep.mubr.f32.mxu0 %v161
    %1343 = vmatmul.mubr.f32.gmra.mxu0 %v160
    %v1344 = vpop.f32.mrf.mxu0
    %v1345 = vadd.f32 0.0, %v1344
    %v1346 = vpop.f32.mrf.mxu0
    %1347 = vmatprep.mubr.f32.mxu0 %v163
    %1348 = vmatmul.mubr.f32.gmra.mxu0 %v162
    %v1349 = vpop.f32.mrf.mxu0
    %v1350 = vadd.f32 0.0, %v1349
    %v1351 = vpop.f32.mrf.mxu0
    %1352 = vmatprep.mubr.f32.mxu0 %v165
    %1353 = vmatmul.mubr.f32.gmra.mxu0 %v164
    %v1354 = vpop.f32.mrf.mxu0
    %v1355 = vadd.f32 0.0, %v1354
    %v1356 = vpop.f32.mrf.mxu0
    %1357 = vmatprep.mubr.f32.mxu0 %v167
    %1358 = vmatmul.mubr.f32.gmra.mxu0 %v166
    %v1359 = vpop.f32.mrf.mxu0
    %v1360 = vadd.f32 0.0, %v1359
    %v1361 = vpop.f32.mrf.mxu0
    %1362 = vmatprep.mubr.f32.mxu0 %v169
    %1363 = vmatmul.mubr.f32.gmra.mxu0 %v168
    %v1364 = vpop.f32.mrf.mxu0
    %v1365 = vadd.f32 0.0, %v1364
    %v1366 = vpop.f32.mrf.mxu0
    %1367 = vmatprep.mubr.f32.mxu0 %v171
    %1368 = vmatmul.mubr.f32.gmra.mxu0 %v170
    %v1369 = vpop.f32.mrf.mxu0
    %v1370 = vadd.f32 0.0, %v1369
    %v1371 = vpop.f32.mrf.mxu0
    %1372 = vmatprep.mubr.f32.mxu0 %v173
    %1373 = vmatmul.mubr.f32.gmra.mxu0 %v172
    %v1374 = vpop.f32.mrf.mxu0
    %v1375 = vadd.f32 0.0, %v1374
    %v1376 = vpop.f32.mrf.mxu0
    %1377 = vmatprep.mubr.f32.mxu0 %v175
    %1378 = vmatmul.mubr.f32.gmra.mxu0 %v174
    %v1379 = vpop.f32.mrf.mxu0
    %v1380 = vadd.f32 0.0, %v1379
    %v1381 = vpop.f32.mrf.mxu0
    %1382 = vmatprep.mubr.f32.mxu0 %v177
    %1383 = vmatmul.mubr.f32.gmra.mxu0 %v176
    %v1384 = vpop.f32.mrf.mxu0
    %v1385 = vadd.f32 0.0, %v1384
    %v1386 = vpop.f32.mrf.mxu0
    %1387 = vmatprep.mubr.f32.mxu0 %v179
    %1388 = vmatmul.mubr.f32.gmra.mxu0 %v178
    %v1389 = vpop.f32.mrf.mxu0
    %v1390 = vadd.f32 0.0, %v1389
    %v1391 = vpop.f32.mrf.mxu0
    %1392 = vmatprep.mubr.f32.mxu0 %v181
    %1393 = vmatmul.mubr.f32.gmra.mxu0 %v180
    %v1394 = vpop.f32.mrf.mxu0
    %v1395 = vadd.f32 0.0, %v1394
    %v1396 = vpop.f32.mrf.mxu0
    %1397 = vmatprep.mubr.f32.mxu0 %v183
    %1398 = vmatmul.mubr.f32.gmra.mxu0 %v182
    %v1399 = vpop.f32.mrf.mxu0
    %v1400 = vadd.f32 0.0, %v1399
    %v1401 = vpop.f32.mrf.mxu0
    %1402 = vmatprep.mubr.f32.mxu0 %v185
    %1403 = vmatmul.mubr.f32.gmra.mxu0 %v184
    %v1404 = vpop.f32.mrf.mxu0
    %v1405 = vadd.f32 0.0, %v1404
    %v1406 = vpop.f32.mrf.mxu0
    %1407 = vmatprep.mubr.f32.mxu0 %v187
    %1408 = vmatmul.mubr.f32.gmra.mxu0 %v186
    %v1409 = vpop.f32.mrf.mxu0
    %v1410 = vadd.f32 0.0, %v1409
    %v1411 = vpop.f32.mrf.mxu0
    %1412 = vmatprep.mubr.f32.mxu0 %v189
    %1413 = vmatmul.mubr.f32.gmra.mxu0 %v188
    %v1414 = vpop.f32.mrf.mxu0
    %v1415 = vadd.f32 0.0, %v1414
    %v1416 = vpop.f32.mrf.mxu0
    %1417 = vmatprep.mubr.f32.mxu0 %v191
    %1418 = vmatmul.mubr.f32.gmra.mxu0 %v190
    %v1419 = vpop.f32.mrf.mxu0
    %v1420 = vadd.f32 0.0, %v1419
    %v1421 = vpop.f32.mrf.mxu0
    %1422 = vmatprep.mubr.f32.mxu0 %v193
    %1423 = vmatmul.mubr.f32.gmra.mxu0 %v192
    %v1424 = vpop.f32.mrf.mxu0
    %v1425 = vadd.f32 0.0, %v1424
    %v1426 = vpop.f32.mrf.mxu0
    %1427 = vmatprep.mubr.f32.mxu0 %v195
    %1428 = vmatmul.mubr.f32.gmra.mxu0 %v194
    %v1429 = vpop.f32.mrf.mxu0
    %v1430 = vadd.f32 0.0, %v1429
    %v1431 = vpop.f32.mrf.mxu0
    %1432 = vmatprep.mubr.f32.mxu0 %v197
    %1433 = vmatmul.mubr.f32.gmra.mxu0 %v196
    %v1434 = vpop.f32.mrf.mxu0
    %v1435 = vadd.f32 0.0, %v1434
    %v1436 = vpop.f32.mrf.mxu0
    %1437 = vmatprep.mubr.f32.mxu0 %v199
    %1438 = vmatmul.mubr.f32.gmra.mxu0 %v198
    %v1439 = vpop.f32.mrf.mxu0
    %v1440 = vadd.f32 0.0, %v1439
    %v1441 = vpop.f32.mrf.mxu0
    %1442 = vmatprep.mubr.f32.mxu0 %v201
    %1443 = vmatmul.mubr.f32.gmra.mxu0 %v200
    %v1444 = vpop.f32.mrf.mxu0
    %v1445 = vadd.f32 0.0, %v1444
    %v1446 = vpop.f32.mrf.mxu0
    %1447 = vmatprep.mubr.f32.mxu0 %v203
    %1448 = vmatmul.mubr.f32.gmra.mxu0 %v202
    %v1449 = vpop.f32.mrf.mxu0
    %v1450 = vadd.f32 0.0, %v1449
    %v1451 = vpop.f32.mrf.mxu0
    %1452 = vmatprep.mubr.f32.mxu0 %v205
    %1453 = vmatmul.mubr.f32.gmra.mxu0 %v204
    %v1454 = vpop.f32.mrf.mxu0
    %v1455 = vadd.f32 0.0, %v1454
    %v1456 = vpop.f32.mrf.mxu0
    %1457 = vmatprep.mubr.f32.mxu0 %v207
    %1458 = vmatmul.mubr.f32.gmra.mxu0 %v206
    %v1459 = vpop.f32.mrf.mxu0
    %v1460 = vadd.f32 0.0, %v1459
    %v1461 = vpop.f32.mrf.mxu0
    %1462 = vmatprep.mubr.f32.mxu0 %v209
    %1463 = vmatmul.mubr.f32.gmra.mxu0 %v208
    %v1464 = vpop.f32.mrf.mxu0
    %v1465 = vadd.f32 0.0, %v1464
    %v1466 = vpop.f32.mrf.mxu0
    %1467 = vmatprep.mubr.f32.mxu0 %v211
    %1468 = vmatmul.mubr.f32.gmra.mxu0 %v210
    %v1469 = vpop.f32.mrf.mxu0
    %v1470 = vadd.f32 0.0, %v1469
    %v1471 = vpop.f32.mrf.mxu0
    %1472 = vmatprep.mubr.f32.mxu0 %v213
    %1473 = vmatmul.mubr.f32.gmra.mxu0 %v212
    %v1474 = vpop.f32.mrf.mxu0
    %v1475 = vadd.f32 0.0, %v1474
    %v1476 = vpop.f32.mrf.mxu0
    %1477 = vmatprep.mubr.f32.mxu0 %v215
    %1478 = vmatmul.mubr.f32.gmra.mxu0 %v214
    %v1479 = vpop.f32.mrf.mxu0
    %v1480 = vadd.f32 0.0, %v1479
    %v1481 = vpop.f32.mrf.mxu0
    %1482 = vdwg.mxu0
    %v1483 = vld [vmem:[#allocation10] sm:$0xff]
    %v1484 = vld [vmem:[#allocation10 + $0x8] sm:$0xff]
    %v1485 = vld [vmem:[#allocation10 + $0x10] sm:$0xff]
    %v1486 = vld [vmem:[#allocation10 + $0x18] sm:$0xff]
    %v1487 = vld [vmem:[#allocation10 + $0x20] sm:$0xff]
    %v1488 = vld [vmem:[#allocation10 + $0x28] sm:$0xff]
    %v1489 = vld [vmem:[#allocation10 + $0x30] sm:$0xff]
    %v1490 = vld [vmem:[#allocation10 + $0x38] sm:$0xff]
    %v1491 = vld [vmem:[#allocation10 + $0x40] sm:$0xff]
    %v1492 = vld [vmem:[#allocation10 + $0x48] sm:$0xff]
    %v1493 = vld [vmem:[#allocation10 + $0x50] sm:$0xff]
    %v1494 = vld [vmem:[#allocation10 + $0x58] sm:$0xff]
    %v1495 = vld [vmem:[#allocation10 + $0x60] sm:$0xff]
    %v1496 = vld [vmem:[#allocation10 + $0x68] sm:$0xff]
    %v1497 = vld [vmem:[#allocation10 + $0x70] sm:$0xff]
    %v1498 = vld [vmem:[#allocation10 + $0x78] sm:$0xff]
    %v1499 = vld [vmem:[%s7] sm:$0x1]
    %v1501 = vlaneseq
    %v1502 = vshrl.u32 %v1501, 7
    %v1503 = vsub.s32 0, %v1502
    %v1504 = vrot.slane %v1499, %v1503
    %1506 = vmatprep.subr.mxu0 0.0
    %1507 = vmatpush1.msra.mxu0 %v1498
    %1508 = vmatprep.subr.mxu0 0.0
    %1509 = vmatpush1.msra.mxu0 %v1497
    %1510 = vmatprep.subr.mxu0 0.0
    %1511 = vmatpush1.msra.mxu0 %v1496
    %1512 = vmatprep.subr.mxu0 0.0
    %1513 = vmatpush1.msra.mxu0 %v1495
    %1514 = vmatprep.subr.mxu0 0.0
    %1515 = vmatpush1.msra.mxu0 %v1494
    %1516 = vmatprep.subr.mxu0 0.0
    %1517 = vmatpush1.msra.mxu0 %v1493
    %1518 = vmatprep.subr.mxu0 0.0
    %1519 = vmatpush1.msra.mxu0 %v1492
    %1520 = vmatprep.subr.mxu0 0.0
    %1521 = vmatpush1.msra.mxu0 %v1491
    %1522 = vmatprep.subr.mxu0 0.0
    %1523 = vmatpush1.msra.mxu0 %v1490
    %1524 = vmatprep.subr.mxu0 0.0
    %1525 = vmatpush1.msra.mxu0 %v1489
    %1526 = vmatprep.subr.mxu0 0.0
    %1527 = vmatpush1.msra.mxu0 %v1488
    %1528 = vmatprep.subr.mxu0 0.0
    %1529 = vmatpush1.msra.mxu0 %v1487
    %1530 = vmatprep.subr.mxu0 0.0
    %1531 = vmatpush1.msra.mxu0 %v1486
    %1532 = vmatprep.subr.mxu0 0.0
    %1533 = vmatpush1.msra.mxu0 %v1485
    %1534 = vmatprep.subr.mxu0 0.0
    %1535 = vmatpush1.msra.mxu0 %v1484
    %1536 = vmatprep.subr.mxu0 0.0
    %1537 = vmatpush1.msra.mxu0 %v1483
    %1538 = vmatprep.subr.mxu0 0.0
    %1539 = vmatpush2.msra.mxu0 0.0
    %1540 = vmatprep.subr.mxu0 0.0
    %1541 = vmatpush2.msra.mxu0 0.0
    %1542 = vmatprep.subr.mxu0 0.0
    %1543 = vmatpush2.msra.mxu0 0.0
    %1544 = vmatprep.subr.mxu0 0.0
    %1545 = vmatpush2.msra.mxu0 0.0
    %1546 = vmatprep.subr.mxu0 0.0
    %1547 = vmatpush2.msra.mxu0 0.0
    %1548 = vmatprep.subr.mxu0 0.0
    %1549 = vmatpush2.msra.mxu0 0.0
    %1550 = vmatprep.subr.mxu0 0.0
    %1551 = vmatpush2.msra.mxu0 0.0
    %1552 = vmatprep.subr.mxu0 0.0
    %1553 = vmatpush2.msra.mxu0 0.0
    %1554 = vmatprep.subr.mxu0 0.0
    %1555 = vmatpush2.msra.mxu0 0.0
    %1556 = vmatprep.subr.mxu0 0.0
    %1557 = vmatpush2.msra.mxu0 0.0
    %1558 = vmatprep.subr.mxu0 0.0
    %1559 = vmatpush2.msra.mxu0 0.0
    %1560 = vmatprep.subr.mxu0 0.0
    %1561 = vmatpush2.msra.mxu0 0.0
    %1562 = vmatprep.subr.mxu0 0.0
    %1563 = vmatpush2.msra.mxu0 0.0
    %1564 = vmatprep.subr.mxu0 0.0
    %1565 = vmatpush2.msra.mxu0 0.0
    %1566 = vmatprep.subr.mxu0 0.0
    %1567 = vmatpush2.msra.mxu0 0.0
    %1568 = vmatprep.subr.mxu0 0.0
    %1569 = vmatpush2.msra.mxu0 0.0
    %1570 = vmatprep.mubr.f32.mxu0 0.0
    %1571 = vmatmul.mubr.f32.gmra.mxu0 %v1325
    %v1572 = vpop.f32.mrf.mxu0
    %v1573 = vadd.f32 %v1504, %v1572
    %v1574 = vpop.f32.mrf.mxu0
    %1575 = vmatprep.mubr.f32.mxu0 0.0
    %1576 = vmatmul.mubr.f32.gmra.mxu0 %v1330
    %v1577 = vpop.f32.mrf.mxu0
    %v1578 = vadd.f32 %v1504, %v1577
    %v1579 = vpop.f32.mrf.mxu0
    %1580 = vmatprep.mubr.f32.mxu0 0.0
    %1581 = vmatmul.mubr.f32.gmra.mxu0 %v1335
    %v1582 = vpop.f32.mrf.mxu0
    %v1583 = vadd.f32 %v1504, %v1582
    %v1584 = vpop.f32.mrf.mxu0
    %1585 = vmatprep.mubr.f32.mxu0 0.0
    %1586 = vmatmul.mubr.f32.gmra.mxu0 %v1340
    %v1587 = vpop.f32.mrf.mxu0
    %v1588 = vadd.f32 %v1504, %v1587
    %v1589 = vpop.f32.mrf.mxu0
    %1590 = vmatprep.mubr.f32.mxu0 0.0
    %1591 = vmatmul.mubr.f32.gmra.mxu0 %v1345
    %v1592 = vpop.f32.mrf.mxu0
    %v1593 = vadd.f32 %v1504, %v1592
    %v1594 = vpop.f32.mrf.mxu0
    %1595 = vmatprep.mubr.f32.mxu0 0.0
    %1596 = vmatmul.mubr.f32.gmra.mxu0 %v1350
    %v1597 = vpop.f32.mrf.mxu0
    %v1598 = vadd.f32 %v1504, %v1597
    %v1599 = vpop.f32.mrf.mxu0
    %1600 = vmatprep.mubr.f32.mxu0 0.0
    %1601 = vmatmul.mubr.f32.gmra.mxu0 %v1355
    %v1602 = vpop.f32.mrf.mxu0
    %v1603 = vadd.f32 %v1504, %v1602
    %v1604 = vpop.f32.mrf.mxu0
    %1605 = vmatprep.mubr.f32.mxu0 0.0
    %1606 = vmatmul.mubr.f32.gmra.mxu0 %v1360
    %v1607 = vpop.f32.mrf.mxu0
    %v1608 = vadd.f32 %v1504, %v1607
    %v1609 = vpop.f32.mrf.mxu0
    %1610 = vmatprep.mubr.f32.mxu0 0.0
    %1611 = vmatmul.mubr.f32.gmra.mxu0 %v1365
    %v1612 = vpop.f32.mrf.mxu0
    %v1613 = vadd.f32 %v1504, %v1612
    %v1614 = vpop.f32.mrf.mxu0
    %1615 = vmatprep.mubr.f32.mxu0 0.0
    %1616 = vmatmul.mubr.f32.gmra.mxu0 %v1370
    %v1617 = vpop.f32.mrf.mxu0
    %v1618 = vadd.f32 %v1504, %v1617
    %v1619 = vpop.f32.mrf.mxu0
    %1620 = vmatprep.mubr.f32.mxu0 0.0
    %1621 = vmatmul.mubr.f32.gmra.mxu0 %v1375
    %v1622 = vpop.f32.mrf.mxu0
    %v1623 = vadd.f32 %v1504, %v1622
    %v1624 = vpop.f32.mrf.mxu0
    %1625 = vmatprep.mubr.f32.mxu0 0.0
    %1626 = vmatmul.mubr.f32.gmra.mxu0 %v1380
    %v1627 = vpop.f32.mrf.mxu0
    %v1628 = vadd.f32 %v1504, %v1627
    %v1629 = vpop.f32.mrf.mxu0
    %1630 = vmatprep.mubr.f32.mxu0 0.0
    %1631 = vmatmul.mubr.f32.gmra.mxu0 %v1385
    %v1632 = vpop.f32.mrf.mxu0
    %v1633 = vadd.f32 %v1504, %v1632
    %v1634 = vpop.f32.mrf.mxu0
    %1635 = vmatprep.mubr.f32.mxu0 0.0
    %1636 = vmatmul.mubr.f32.gmra.mxu0 %v1390
    %v1637 = vpop.f32.mrf.mxu0
    %v1638 = vadd.f32 %v1504, %v1637
    %v1639 = vpop.f32.mrf.mxu0
    %1640 = vmatprep.mubr.f32.mxu0 0.0
    %1641 = vmatmul.mubr.f32.gmra.mxu0 %v1395
    %v1642 = vpop.f32.mrf.mxu0
    %v1643 = vadd.f32 %v1504, %v1642
    %v1644 = vpop.f32.mrf.mxu0
    %1645 = vmatprep.mubr.f32.mxu0 0.0
    %1646 = vmatmul.mubr.f32.gmra.mxu0 %v1400
    %v1647 = vpop.f32.mrf.mxu0
    %v1648 = vadd.f32 %v1504, %v1647
    %v1649 = vpop.f32.mrf.mxu0
    %1650 = vmatprep.mubr.f32.mxu0 0.0
    %1651 = vmatmul.mubr.f32.gmra.mxu0 %v1405
    %v1652 = vpop.f32.mrf.mxu0
    %v1653 = vadd.f32 %v1504, %v1652
    %v1654 = vpop.f32.mrf.mxu0
    %1655 = vmatprep.mubr.f32.mxu0 0.0
    %1656 = vmatmul.mubr.f32.gmra.mxu0 %v1410
    %v1657 = vpop.f32.mrf.mxu0
    %v1658 = vadd.f32 %v1504, %v1657
    %v1659 = vpop.f32.mrf.mxu0
    %1660 = vmatprep.mubr.f32.mxu0 0.0
    %1661 = vmatmul.mubr.f32.gmra.mxu0 %v1415
    %v1662 = vpop.f32.mrf.mxu0
    %v1663 = vadd.f32 %v1504, %v1662
    %v1664 = vpop.f32.mrf.mxu0
    %1665 = vmatprep.mubr.f32.mxu0 0.0
    %1666 = vmatmul.mubr.f32.gmra.mxu0 %v1420
    %v1667 = vpop.f32.mrf.mxu0
    %v1668 = vadd.f32 %v1504, %v1667
    %v1669 = vpop.f32.mrf.mxu0
    %1670 = vmatprep.mubr.f32.mxu0 0.0
    %1671 = vmatmul.mubr.f32.gmra.mxu0 %v1425
    %v1672 = vpop.f32.mrf.mxu0
    %v1673 = vadd.f32 %v1504, %v1672
    %v1674 = vpop.f32.mrf.mxu0
    %1675 = vmatprep.mubr.f32.mxu0 0.0
    %1676 = vmatmul.mubr.f32.gmra.mxu0 %v1430
    %v1677 = vpop.f32.mrf.mxu0
    %v1678 = vadd.f32 %v1504, %v1677
    %v1679 = vpop.f32.mrf.mxu0
    %1680 = vmatprep.mubr.f32.mxu0 0.0
    %1681 = vmatmul.mubr.f32.gmra.mxu0 %v1435
    %v1682 = vpop.f32.mrf.mxu0
    %v1683 = vadd.f32 %v1504, %v1682
    %v1684 = vpop.f32.mrf.mxu0
    %1685 = vmatprep.mubr.f32.mxu0 0.0
    %1686 = vmatmul.mubr.f32.gmra.mxu0 %v1440
    %v1687 = vpop.f32.mrf.mxu0
    %v1688 = vadd.f32 %v1504, %v1687
    %v1689 = vpop.f32.mrf.mxu0
    %1690 = vmatprep.mubr.f32.mxu0 0.0
    %1691 = vmatmul.mubr.f32.gmra.mxu0 %v1445
    %v1692 = vpop.f32.mrf.mxu0
    %v1693 = vadd.f32 %v1504, %v1692
    %v1694 = vpop.f32.mrf.mxu0
    %1695 = vmatprep.mubr.f32.mxu0 0.0
    %1696 = vmatmul.mubr.f32.gmra.mxu0 %v1450
    %v1697 = vpop.f32.mrf.mxu0
    %v1698 = vadd.f32 %v1504, %v1697
    %v1699 = vpop.f32.mrf.mxu0
    %1700 = vmatprep.mubr.f32.mxu0 0.0
    %1701 = vmatmul.mubr.f32.gmra.mxu0 %v1455
    %v1702 = vpop.f32.mrf.mxu0
    %v1703 = vadd.f32 %v1504, %v1702
    %v1704 = vpop.f32.mrf.mxu0
    %1705 = vmatprep.mubr.f32.mxu0 0.0
    %1706 = vmatmul.mubr.f32.gmra.mxu0 %v1460
    %v1707 = vpop.f32.mrf.mxu0
    %v1708 = vadd.f32 %v1504, %v1707
    %v1709 = vpop.f32.mrf.mxu0
    %1710 = vmatprep.mubr.f32.mxu0 0.0
    %1711 = vmatmul.mubr.f32.gmra.mxu0 %v1465
    %v1712 = vpop.f32.mrf.mxu0
    %v1713 = vadd.f32 %v1504, %v1712
    %v1714 = vpop.f32.mrf.mxu0
    %1715 = vmatprep.mubr.f32.mxu0 0.0
    %1716 = vmatmul.mubr.f32.gmra.mxu0 %v1470
    %v1717 = vpop.f32.mrf.mxu0
    %v1718 = vadd.f32 %v1504, %v1717
    %v1719 = vpop.f32.mrf.mxu0
    %1720 = vmatprep.mubr.f32.mxu0 0.0
    %1721 = vmatmul.mubr.f32.gmra.mxu0 %v1475
    %v1722 = vpop.f32.mrf.mxu0
    %v1723 = vadd.f32 %v1504, %v1722
    %v1724 = vpop.f32.mrf.mxu0
    %1725 = vmatprep.mubr.f32.mxu0 0.0
    %1726 = vmatmul.mubr.f32.gmra.mxu0 %v1480
    %v1727 = vpop.f32.mrf.mxu0
    %v1728 = vadd.f32 %v1504, %v1727
    %v1729 = vpop.f32.mrf.mxu0
    %1730 = vdwg.mxu0
    %v1731 = vld [vmem:[#allocation11] sm:$0xff]
    %v1732 = vld [vmem:[#allocation11 + $0x8] sm:$0xff]
    %1733 = vmatprep.subr.mxu0 0.0
    %1734 = vmatpush1.msra.mxu0 %v1648
    %1735 = vmatprep.subr.mxu0 0.0
    %1736 = vmatpush1.msra.mxu0 %v1643
    %1737 = vmatprep.subr.mxu0 0.0
    %1738 = vmatpush1.msra.mxu0 %v1638
    %1739 = vmatprep.subr.mxu0 0.0
    %1740 = vmatpush1.msra.mxu0 %v1633
    %1741 = vmatprep.subr.mxu0 0.0
    %1742 = vmatpush1.msra.mxu0 %v1628
    %1743 = vmatprep.subr.mxu0 0.0
    %1744 = vmatpush1.msra.mxu0 %v1623
    %1745 = vmatprep.subr.mxu0 0.0
    %1746 = vmatpush1.msra.mxu0 %v1618
    %1747 = vmatprep.subr.mxu0 0.0
    %1748 = vmatpush1.msra.mxu0 %v1613
    %1749 = vmatprep.subr.mxu0 0.0
    %1750 = vmatpush1.msra.mxu0 %v1608
    %1751 = vmatprep.subr.mxu0 0.0
    %1752 = vmatpush1.msra.mxu0 %v1603
    %1753 = vmatprep.subr.mxu0 0.0
    %1754 = vmatpush1.msra.mxu0 %v1598
    %1755 = vmatprep.subr.mxu0 0.0
    %1756 = vmatpush1.msra.mxu0 %v1593
    %1757 = vmatprep.subr.mxu0 0.0
    %1758 = vmatpush1.msra.mxu0 %v1588
    %1759 = vmatprep.subr.mxu0 0.0
    %1760 = vmatpush1.msra.mxu0 %v1583
    %1761 = vmatprep.subr.mxu0 0.0
    %1762 = vmatpush1.msra.mxu0 %v1578
    %1763 = vmatprep.subr.mxu0 0.0
    %1764 = vmatpush1.msra.mxu0 %v1573
    %1765 = vmatprep.subr.mxu0 0.0
    %1766 = vmatpush2.msra.mxu0 %v1728
    %1767 = vmatprep.subr.mxu0 0.0
    %1768 = vmatpush2.msra.mxu0 %v1723
    %1769 = vmatprep.subr.mxu0 0.0
    %1770 = vmatpush2.msra.mxu0 %v1718
    %1771 = vmatprep.subr.mxu0 0.0
    %1772 = vmatpush2.msra.mxu0 %v1713
    %1773 = vmatprep.subr.mxu0 0.0
    %1774 = vmatpush2.msra.mxu0 %v1708
    %1775 = vmatprep.subr.mxu0 0.0
    %1776 = vmatpush2.msra.mxu0 %v1703
    %1777 = vmatprep.subr.mxu0 0.0
    %1778 = vmatpush2.msra.mxu0 %v1698
    %1779 = vmatprep.subr.mxu0 0.0
    %1780 = vmatpush2.msra.mxu0 %v1693
    %1781 = vmatprep.subr.mxu0 0.0
    %1782 = vmatpush2.msra.mxu0 %v1688
    %1783 = vmatprep.subr.mxu0 0.0
    %1784 = vmatpush2.msra.mxu0 %v1683
    %1785 = vmatprep.subr.mxu0 0.0
    %1786 = vmatpush2.msra.mxu0 %v1678
    %1787 = vmatprep.subr.mxu0 0.0
    %1788 = vmatpush2.msra.mxu0 %v1673
    %1789 = vmatprep.subr.mxu0 0.0
    %1790 = vmatpush2.msra.mxu0 %v1668
    %1791 = vmatprep.subr.mxu0 0.0
    %1792 = vmatpush2.msra.mxu0 %v1663
    %1793 = vmatprep.subr.mxu0 0.0
    %1794 = vmatpush2.msra.mxu0 %v1658
    %1795 = vmatprep.subr.mxu0 0.0
    %1796 = vmatpush2.msra.mxu0 %v1653
    %1797 = vmatprep.mubr.f32.mxu0 %v1732
    %1798 = vmatmul.mubr.f32.gmra.mxu0 %v1731
    %v1799 = vpop.f32.mrf.mxu0
    %v1800 = vadd.f32 0.0, %v1799
    %v1801 = vpop.f32.mrf.mxu0
    %1802 = vdwg.mxu0
    %v1803 = vld [vmem:[#allocation13] sm:$0xff]
    %v1804 = vld [vmem:[#allocation13 + $0x8] sm:$0xff]
    %v1805 = vld [vmem:[#allocation13 + $0x10] sm:$0xff]
    %v1806 = vld [vmem:[#allocation13 + $0x18] sm:$0xff]
    %v1807 = vld [vmem:[#allocation13 + $0x20] sm:$0xff]
    %v1808 = vld [vmem:[#allocation13 + $0x28] sm:$0xff]
    %v1809 = vld [vmem:[#allocation13 + $0x30] sm:$0xff]
    %v1810 = vld [vmem:[#allocation13 + $0x38] sm:$0xff]
    %v1811 = vld [vmem:[#allocation13 + $0x40] sm:$0xff]
    %v1812 = vld [vmem:[#allocation13 + $0x48] sm:$0xff]
    %v1813 = vld [vmem:[#allocation13 + $0x50] sm:$0xff]
    %v1814 = vld [vmem:[#allocation13 + $0x58] sm:$0xff]
    %v1815 = vld [vmem:[#allocation13 + $0x60] sm:$0xff]
    %v1816 = vld [vmem:[#allocation13 + $0x68] sm:$0xff]
    %v1817 = vld [vmem:[#allocation13 + $0x70] sm:$0xff]
    %v1818 = vld [vmem:[#allocation13 + $0x78] sm:$0xff]
    %v1819 = vld [vmem:[%s10] sm:$0x1]
    %v1821 = vlaneseq
    %v1822 = vshrl.u32 %v1821, 7
    %v1823 = vsub.s32 0, %v1822
    %v1824 = vrot.slane %v1819, %v1823
    %1826 = vmatprep.subr.mxu0 0.0
    %1827 = vmatpush1.msra.mxu0 %v1818
    %1828 = vmatprep.subr.mxu0 0.0
    %1829 = vmatpush1.msra.mxu0 %v1817
    %1830 = vmatprep.subr.mxu0 0.0
    %1831 = vmatpush1.msra.mxu0 %v1816
    %1832 = vmatprep.subr.mxu0 0.0
    %1833 = vmatpush1.msra.mxu0 %v1815
    %1834 = vmatprep.subr.mxu0 0.0
    %1835 = vmatpush1.msra.mxu0 %v1814
    %1836 = vmatprep.subr.mxu0 0.0
    %1837 = vmatpush1.msra.mxu0 %v1813
    %1838 = vmatprep.subr.mxu0 0.0
    %1839 = vmatpush1.msra.mxu0 %v1812
    %1840 = vmatprep.subr.mxu0 0.0
    %1841 = vmatpush1.msra.mxu0 %v1811
    %1842 = vmatprep.subr.mxu0 0.0
    %1843 = vmatpush1.msra.mxu0 %v1810
    %1844 = vmatprep.subr.mxu0 0.0
    %1845 = vmatpush1.msra.mxu0 %v1809
    %1846 = vmatprep.subr.mxu0 0.0
    %1847 = vmatpush1.msra.mxu0 %v1808
    %1848 = vmatprep.subr.mxu0 0.0
    %1849 = vmatpush1.msra.mxu0 %v1807
    %1850 = vmatprep.subr.mxu0 0.0
    %1851 = vmatpush1.msra.mxu0 %v1806
    %1852 = vmatprep.subr.mxu0 0.0
    %1853 = vmatpush1.msra.mxu0 %v1805
    %1854 = vmatprep.subr.mxu0 0.0
    %1855 = vmatpush1.msra.mxu0 %v1804
    %1856 = vmatprep.subr.mxu0 0.0
    %1857 = vmatpush1.msra.mxu0 %v1803
    %1858 = vmatprep.subr.mxu0 0.0
    %1859 = vmatpush2.msra.mxu0 0.0
    %1860 = vmatprep.subr.mxu0 0.0
    %1861 = vmatpush2.msra.mxu0 0.0
    %1862 = vmatprep.subr.mxu0 0.0
    %1863 = vmatpush2.msra.mxu0 0.0
    %1864 = vmatprep.subr.mxu0 0.0
    %1865 = vmatpush2.msra.mxu0 0.0
    %1866 = vmatprep.subr.mxu0 0.0
    %1867 = vmatpush2.msra.mxu0 0.0
    %1868 = vmatprep.subr.mxu0 0.0
    %1869 = vmatpush2.msra.mxu0 0.0
    %1870 = vmatprep.subr.mxu0 0.0
    %1871 = vmatpush2.msra.mxu0 0.0
    %1872 = vmatprep.subr.mxu0 0.0
    %1873 = vmatpush2.msra.mxu0 0.0
    %1874 = vmatprep.subr.mxu0 0.0
    %1875 = vmatpush2.msra.mxu0 0.0
    %1876 = vmatprep.subr.mxu0 0.0
    %1877 = vmatpush2.msra.mxu0 0.0
    %1878 = vmatprep.subr.mxu0 0.0
    %1879 = vmatpush2.msra.mxu0 0.0
    %1880 = vmatprep.subr.mxu0 0.0
    %1881 = vmatpush2.msra.mxu0 0.0
    %1882 = vmatprep.subr.mxu0 0.0
    %1883 = vmatpush2.msra.mxu0 0.0
    %1884 = vmatprep.subr.mxu0 0.0
    %1885 = vmatpush2.msra.mxu0 0.0
    %1886 = vmatprep.subr.mxu0 0.0
    %1887 = vmatpush2.msra.mxu0 0.0
    %1888 = vmatprep.subr.mxu0 0.0
    %1889 = vmatpush2.msra.mxu0 0.0
    %1890 = vmatprep.mubr.f32.mxu0 0.0
    %1891 = vmatmul.mubr.f32.gmra.mxu0 %v1800
    %v1892 = vpop.f32.mrf.mxu0
    %v1893 = vadd.f32 %v1824, %v1892
    %v1894 = vpop.f32.mrf.mxu0
    %1895 = vdwg.mxu0
    %v1896 = vmax.f32 %v1893, 0.0
    %v1897 = vld [vmem:[#allocation14] sm:$0xff]
    %v1898 = vld [vmem:[#allocation14 + $0x8] sm:$0xff]
    %v1899 = vld [vmem:[#allocation14 + $0x10] sm:$0xff]
    %v1900 = vld [vmem:[#allocation14 + $0x18] sm:$0xff]
    %v1901 = vld [vmem:[#allocation14 + $0x20] sm:$0xff]
    %v1902 = vld [vmem:[#allocation14 + $0x28] sm:$0xff]
    %v1903 = vld [vmem:[#allocation14 + $0x30] sm:$0xff]
    %v1904 = vld [vmem:[#allocation14 + $0x38] sm:$0xff]
    %v1905 = vld [vmem:[#allocation14 + $0x40] sm:$0xff]
    %v1906 = vld [vmem:[#allocation14 + $0x48] sm:$0xff]
    %v1907 = vld [vmem:[#allocation14 + $0x50] sm:$0xff]
    %v1908 = vld [vmem:[#allocation14 + $0x58] sm:$0xff]
    %v1909 = vld [vmem:[#allocation14 + $0x60] sm:$0xff]
    %v1910 = vld [vmem:[#allocation14 + $0x68] sm:$0xff]
    %v1911 = vld [vmem:[#allocation14 + $0x70] sm:$0xff]
    %v1912 = vld [vmem:[#allocation14 + $0x78] sm:$0xff]
    %v1913 = vld [vmem:[%s12] sm:$0x1]
    %v1915 = vlaneseq
    %v1916 = vshrl.u32 %v1915, 7
    %v1917 = vsub.s32 0, %v1916
    %v1918 = vrot.slane %v1913, %v1917
    %1920 = vmatprep.subr.mxu0 0.0
    %1921 = vmatpush1.msra.mxu0 %v1912
    %1922 = vmatprep.subr.mxu0 0.0
    %1923 = vmatpush1.msra.mxu0 %v1911
    %1924 = vmatprep.subr.mxu0 0.0
    %1925 = vmatpush1.msra.mxu0 %v1910
    %1926 = vmatprep.subr.mxu0 0.0
    %1927 = vmatpush1.msra.mxu0 %v1909
    %1928 = vmatprep.subr.mxu0 0.0
    %1929 = vmatpush1.msra.mxu0 %v1908
    %1930 = vmatprep.subr.mxu0 0.0
    %1931 = vmatpush1.msra.mxu0 %v1907
    %1932 = vmatprep.subr.mxu0 0.0
    %1933 = vmatpush1.msra.mxu0 %v1906
    %1934 = vmatprep.subr.mxu0 0.0
    %1935 = vmatpush1.msra.mxu0 %v1905
    %1936 = vmatprep.subr.mxu0 0.0
    %1937 = vmatpush1.msra.mxu0 %v1904
    %1938 = vmatprep.subr.mxu0 0.0
    %1939 = vmatpush1.msra.mxu0 %v1903
    %1940 = vmatprep.subr.mxu0 0.0
    %1941 = vmatpush1.msra.mxu0 %v1902
    %1942 = vmatprep.subr.mxu0 0.0
    %1943 = vmatpush1.msra.mxu0 %v1901
    %1944 = vmatprep.subr.mxu0 0.0
    %1945 = vmatpush1.msra.mxu0 %v1900
    %1946 = vmatprep.subr.mxu0 0.0
    %1947 = vmatpush1.msra.mxu0 %v1899
    %1948 = vmatprep.subr.mxu0 0.0
    %1949 = vmatpush1.msra.mxu0 %v1898
    %1950 = vmatprep.subr.mxu0 0.0
    %1951 = vmatpush1.msra.mxu0 %v1897
    %1952 = vmatprep.subr.mxu0 0.0
    %1953 = vmatpush2.msra.mxu0 0.0
    %1954 = vmatprep.subr.mxu0 0.0
    %1955 = vmatpush2.msra.mxu0 0.0
    %1956 = vmatprep.subr.mxu0 0.0
    %1957 = vmatpush2.msra.mxu0 0.0
    %1958 = vmatprep.subr.mxu0 0.0
    %1959 = vmatpush2.msra.mxu0 0.0
    %1960 = vmatprep.subr.mxu0 0.0
    %1961 = vmatpush2.msra.mxu0 0.0
    %1962 = vmatprep.subr.mxu0 0.0
    %1963 = vmatpush2.msra.mxu0 0.0
    %1964 = vmatprep.subr.mxu0 0.0
    %1965 = vmatpush2.msra.mxu0 0.0
    %1966 = vmatprep.subr.mxu0 0.0
    %1967 = vmatpush2.msra.mxu0 0.0
    %1968 = vmatprep.subr.mxu0 0.0
    %1969 = vmatpush2.msra.mxu0 0.0
    %1970 = vmatprep.subr.mxu0 0.0
    %1971 = vmatpush2.msra.mxu0 0.0
    %1972 = vmatprep.subr.mxu0 0.0
    %1973 = vmatpush2.msra.mxu0 0.0
    %1974 = vmatprep.subr.mxu0 0.0
    %1975 = vmatpush2.msra.mxu0 0.0
    %1976 = vmatprep.subr.mxu0 0.0
    %1977 = vmatpush2.msra.mxu0 0.0
    %1978 = vmatprep.subr.mxu0 0.0
    %1979 = vmatpush2.msra.mxu0 0.0
    %1980 = vmatprep.subr.mxu0 0.0
    %1981 = vmatpush2.msra.mxu0 0.0
    %1982 = vmatprep.subr.mxu0 0.0
    %1983 = vmatpush2.msra.mxu0 0.0
    %1984 = vmatprep.mubr.f32.mxu0 0.0
    %1985 = vmatmul.mubr.f32.gmra.mxu0 %v1896
    %v1986 = vpop.f32.mrf.mxu0
    %v1987 = vadd.f32 %v1918, %v1986
    %v1988 = vpop.f32.mrf.mxu0
    %1989 = vdwg.mxu0
    %1990 = vst [vmem:[#allocation16] sm:$0xff] %v1987
    // Predicated region
    $region86: #{tpu_custom_call.1} parent=1 // pred_check
      _
    $region87: #{tpu_custom_call.1} parent=1 // pred_check_branch
      %1992 = sbr.rel (0) target = $region89
    $region88: #{tpu_custom_call.1} parent=1 // pred_region
      %s1994 = ssub.s32 128, 128
      %1995 = vsyncadd [#allocation4], %s1994
      %s1997 = sshll.u32 [#allocation16], 4
      %s1998 = int_to_ptr.vmem [resolvable:$true] %s1997
      %2000 = dma.vmem_to_hbm [thread:$0]  %s1998, 128, %s13, [#allocation4]
    $region89: #{tpu_custom_call.1} parent=1 // pred_fallthru
      _
    // Predicated region
    $region90: #{tpu_custom_call.1} parent=1 // pred_check
      _
    $region91: #{tpu_custom_call.1} parent=1 // pred_check_branch
      %2002 = sbr.rel (0) target = $region93
    $region92: #{tpu_custom_call.1} parent=1 // pred_region
      %2003 = dma.done [#allocation4], 128
    $region93: #{tpu_custom_call.1} parent=1 // pred_fallthru
      _
    %2004 = vsyncpa [#allocation3], 1
    %2005 = vsyncpa [#allocation6], 1
    %2006 = vsyncpa [#allocation9], 1
    %2007 = vsyncpa [#allocation12], 1
    %2008 = vsyncpa [#allocation15], 1
    %2009 = vsyncpa [#allocation4], 1

</llo_original>
